<compile_context>
chip_gen: v5e
topology: v5e:2x2
jax: 0.10.0
libtpu: 0.0.40
codegen_flags: <defaults>
</compile_context>

<pallas_src>
import jax
import jax.numpy as jnp
from jax.experimental import pallas as pl
from jax.experimental.pallas import tpu as pltpu


NUM_CLASSES = 8      # incl. background (class 0)
NUM_ANCHORS = 3
HIDDEN = 32
ANCHOR_SCALES = (0.2, 0.35, 0.5)
N_LOC = NUM_ANCHORS * 4
N_CONF = NUM_ANCHORS * NUM_CLASSES
BBOX_ALPHA = 1.5
CONF_ALPHA = 1.0


def _round_up(x, m):
    return ((x + m - 1) // m) * m


# ----------------------------------------------------------------------------
# Pallas kernel 1: fused im2col-conv (+ReLU) + loc/conf heads, tiled over rows
# ----------------------------------------------------------------------------
def _fused_head_kernel(x_ref, wc_ref, bc_ref, wh_ref, bh_ref, o_ref):
    # conv as matmul: [tm, K_pad] @ [K_pad, HIDDEN]  (bf16 in, f32 accumulate)
    feat = jnp.dot(x_ref[...], wc_ref[...], preferred_element_type=jnp.float32)
    feat = jnp.maximum(feat + bc_ref[...], 0.0)              # ReLU in f32 (v5e-safe)
    # both heads in one lane-dense matmul: [tm, HIDDEN] @ [HIDDEN, 128]
    out = jnp.dot(feat.astype(jnp.bfloat16), wh_ref[...],
                  preferred_element_type=jnp.float32)
    o_ref[...] = out + bh_ref[...]


def fused_head_forward(patches2d, w_conv, b_conv, w_heads, b_heads, *, tm=256):
    M, Kp = patches2d.shape
    Kp2, Hd = w_conv.shape
    Hd2, Np = w_heads.shape
    assert Kp == Kp2 and Hd == Hd2
    tm = min(tm, _round_up(M, 8))
    M_pad = _round_up(M, tm)
    if M_pad != M:
        patches2d = jnp.pad(patches2d, ((0, M_pad - M), (0, 0)))
    out = pl.pallas_call(
        _fused_head_kernel,
        grid=(M_pad // tm,),
        out_shape=jax.ShapeDtypeStruct((M_pad, Np), jnp.float32),
        in_specs=[
            pl.BlockSpec((tm, Kp), lambda i: (i, 0)),
            pl.BlockSpec((Kp, Hd), lambda i: (0, 0)),
            pl.BlockSpec((1, Hd), lambda i: (0, 0)),
            pl.BlockSpec((Hd, Np), lambda i: (0, 0)),
            pl.BlockSpec((1, Np), lambda i: (0, 0)),
        ],
        out_specs=pl.BlockSpec((tm, Np), lambda i: (i, 0)),
        compiler_params=pltpu.CompilerParams(
            dimension_semantics=("parallel",)),
    )(patches2d, w_conv, b_conv.reshape(1, Hd), w_heads, b_heads.reshape(1, Np))
    return out[:M]


# ----------------------------------------------------------------------------
# Pallas kernel 2: MultiBox-style loss, lane-dense (transposed) and tiled over priors
# ----------------------------------------------------------------------------
def _multibox_loss_kernel(loc_p_ref, loc_t_ref, conf_ref, lab_ref, sums_ref):
    step = pl.program_id(0)

    @pl.when(step == 0)
    def _():
        sums_ref[0] = jnp.float32(0.0)   # sum smooth-L1 (positives)
        sums_ref[1] = jnp.float32(0.0)   # sum CE
        sums_ref[2] = jnp.float32(0.0)   # num_pos

    labels = lab_ref[...]                                   # [1, tn] int32
    pos = (labels > 0).astype(jnp.float32)                  # matched (non-background) priors
    valid = (labels >= 0).astype(jnp.float32)               # real (non-padded) priors

    # --- localization: smooth-L1 over positive priors
    diff = loc_p_ref[...] - loc_t_ref[...]                  # [4, tn]
    ad = jnp.abs(diff)
    sl1 = jnp.where(ad < 1.0, 0.5 * ad * ad, ad - 0.5)

    # --- confidence: softmax cross-entropy over the class (sublane) axis
    # TODO(synk): Yolact's MultiBoxLoss uses OHEM hard-negative mining; plain CE over all priors here.
    conf = conf_ref[...]                                    # [C, tn]
    m = jnp.max(conf, axis=0, keepdims=True)
    lse = m + jnp.log(jnp.sum(jnp.exp(conf - m), axis=0, keepdims=True))
    cls_iota = jax.lax.broadcasted_iota(jnp.int32, conf.shape, 0)
    picked = jnp.sum(jnp.where(cls_iota == labels, conf, 0.0), axis=0, keepdims=True)
    ce = (lse - picked) * valid

    sums_ref[0] = sums_ref[0] + jnp.sum(sl1 * pos)
    sums_ref[1] = sums_ref[1] + jnp.sum(ce)
    sums_ref[2] = sums_ref[2] + jnp.sum(pos)


def multibox_loss(loc_p, loc_t, conf, labels, *, tn=512):
    """loc_p/loc_t: [N,4] f32, conf: [N,C] f32, labels: [N] int32 -> (loss_b, loss_c)."""
    N, C = conf.shape
    N_pad = _round_up(N, tn)
    pad = N_pad - N
    loc_p_t = jnp.pad(loc_p, ((0, pad), (0, 0))).T.astype(jnp.float32)      # [4, N_pad]
    loc_t_t = jnp.pad(loc_t, ((0, pad), (0, 0))).T.astype(jnp.float32)      # [4, N_pad]
    conf_t = jnp.pad(conf, ((0, pad), (0, 0))).T.astype(jnp.float32)        # [C, N_pad]
    labels_t = jnp.pad(labels.astype(jnp.int32), (0, pad),
                       constant_values=-1).reshape(1, N_pad)                # [1, N_pad]

    sums = pl.pallas_call(
        _multibox_loss_kernel,
        grid=(N_pad // tn,),
        out_shape=jax.ShapeDtypeStruct((3,), jnp.float32),
        in_specs=[
            pl.BlockSpec((4, tn), lambda i: (0, i)),
            pl.BlockSpec((4, tn), lambda i: (0, i)),
            pl.BlockSpec((C, tn), lambda i: (0, i)),
            pl.BlockSpec((1, tn), lambda i: (0, i)),
        ],
        out_specs=pl.BlockSpec(memory_space=pltpu.MemorySpace.SMEM),
        compiler_params=pltpu.CompilerParams(
            dimension_semantics=("arbitrary",)),
    )(loc_p_t, loc_t_t, conf_t, labels_t)

    denom = jnp.maximum(sums[2], 1.0)
    loss_b = sums[0] * BBOX_ALPHA / denom
    loss_c = sums[1] * CONF_ALPHA / denom
    return loss_b, loss_c


# ----------------------------------------------------------------------------
# glue: tiny Yolact-style net (im2col conv + heads) and MultiBox GT matching
# ----------------------------------------------------------------------------
def make_params(key, in_ch):
    k1, k2, k3 = jax.random.split(key, 3)
    K = in_ch * 9
    K_pad = _round_up(K, 32)                                  # sublane-friendly im2col axis
    w_conv = jax.random.normal(k1, (K, HIDDEN), jnp.float32) * 0.1
    w_conv = jnp.pad(w_conv, ((0, K_pad - K), (0, 0)))
    w_loc = jax.random.normal(k2, (HIDDEN, N_LOC), jnp.float32) * 0.1
    w_conf = jax.random.normal(k3, (HIDDEN, N_CONF), jnp.float32) * 0.1
    w_heads = jnp.concatenate([w_loc, w_conf], axis=1)        # [HIDDEN, 36]
    N_pad = _round_up(N_LOC + N_CONF, 128)                    # lane-dense fused head output
    w_heads = jnp.pad(w_heads, ((0, 0), (0, N_pad - (N_LOC + N_CONF))))
    return {
        "w_conv": w_conv.astype(jnp.bfloat16),
        "b_conv": jnp.zeros((HIDDEN,), jnp.float32),
        "w_heads": w_heads.astype(jnp.bfloat16),
        "b_heads": jnp.zeros((N_pad,), jnp.float32),
    }


def make_priors(H, W):
    ys = (jnp.arange(H, dtype=jnp.float32) + 0.5) / H
    xs = (jnp.arange(W, dtype=jnp.float32) + 0.5) / W
    cy = jnp.broadcast_to(ys[:, None, None], (H, W, NUM_ANCHORS))
    cx = jnp.broadcast_to(xs[None, :, None], (H, W, NUM_ANCHORS))
    s = jnp.broadcast_to(jnp.asarray(ANCHOR_SCALES, jnp.float32)[None, None, :], (H, W, NUM_ANCHORS))
    return jnp.stack([cx, cy, s, s], axis=-1).reshape(-1, 4)  # [P, 4] center form


def tiny_yolact_forward(images, params):
    B, C, H, W = images.shape
    x = jnp.transpose(images, (0, 2, 3, 1))                   # NCHW -> NHWC
    patches = jax.lax.conv_general_dilated_patches(
        x, filter_shape=(3, 3), window_strides=(1, 1), padding="SAME",
        dimension_numbers=("NHWC", "HWIO", "NHWC"))           # [B, H, W, C*9]
    K = C * 9
    K_pad = params["w_conv"].shape[0]
    # TODO(synk): at real image sizes, extract the 3x3 neighborhood in-kernel instead of
    #             materializing the 9x im2col slab in HBM.
    patches2d = patches.reshape(B * H * W, K)
    patches2d = jnp.pad(patches2d, ((0, 0), (0, K_pad - K))).astype(jnp.bfloat16)
    out = fused_head_forward(patches2d, params["w_conv"], params["b_conv"],
                             params["w_heads"], params["b_heads"])
    loc = out[:, :N_LOC]
    conf = out[:, N_LOC:N_LOC + N_CONF]
    P = H * W * NUM_ANCHORS
    return loc.reshape(B, P, 4), conf.reshape(B, P, NUM_CLASSES)


def _box_iou(a, b):
    tl = jnp.maximum(a[:, None, :2], b[None, :, :2])
    br = jnp.minimum(a[:, None, 2:], b[None, :, 2:])
    wh = jnp.clip(br - tl, 0.0)
    inter = wh[..., 0] * wh[..., 1]
    area_a = (a[:, 2] - a[:, 0]) * (a[:, 3] - a[:, 1])
    area_b = (b[:, 2] - b[:, 0]) * (b[:, 3] - b[:, 1])
    return inter / (area_a[:, None] + area_b[None, :] - inter + 1e-9)


def _match_one(gt, priors, iou_thresh=0.5):
    gt_boxes, gt_labels = gt[:, :4], gt[:, 4].astype(jnp.int32)
    p_corners = jnp.concatenate(
        [priors[:, :2] - priors[:, 2:] / 2, priors[:, :2] + priors[:, 2:] / 2], axis=1)
    ious = _box_iou(p_corners, gt_boxes)                      # [P, G]
    best_iou = ious.max(axis=1)
    best_idx = ious.argmax(axis=1)
    labels = jnp.where(best_iou > iou_thresh, jnp.take(gt_labels, best_idx), 0)
    matched = jnp.take(gt_boxes, best_idx, axis=0)            # [P, 4]
    m_cxcy = (matched[:, :2] + matched[:, 2:]) / 2
    m_wh = matched[:, 2:] - matched[:, :2]
    g_cxcy = (m_cxcy - priors[:, :2]) / (0.1 * priors[:, 2:])
    g_wh = jnp.log(jnp.maximum(m_wh, 1e-6) / priors[:, 2:]) / 0.2
    return jnp.concatenate([g_cxcy, g_wh], axis=1), labels


def net_loss_forward(images, targets, masks, num_crowds, params, priors):
    """NetLoss.forward: preds = net(images); losses = criterion(net, preds, targets, masks, num_crowds)."""
    del masks, num_crowds  # TODO(synk): lincomb mask loss, semantic-seg loss and crowd handling omitted.
    loc_p, conf_p = tiny_yolact_forward(images, params)
    loc_t, labels = jax.vmap(_match_one, in_axes=(0, None))(targets, priors)
    B, P, _ = loc_p.shape
    loss_b, loss_c = multibox_loss(
        loc_p.reshape(B * P, 4),
        loc_t.reshape(B * P, 4),
        conf_p.reshape(B * P, NUM_CLASSES),
        labels.reshape(B * P),
    )
    return {"B": loss_b, "C": loss_c}


# ----------------------------------------------------------------------------
if __name__ == "__main__":
    key = jax.random.PRNGKey(0)
    k_img, k_par = jax.random.split(key)

    B, C, H, W = 2, 3, 16, 16
    images = jax.random.normal(k_img, (B, C, H, W), jnp.float32)

    # targets: per-image GT boxes (x1, y1, x2, y2, class_id), normalized coords
    targets = jnp.array(
        [[[0.10, 0.10, 0.40, 0.50, 1.0],
          [0.50, 0.20, 0.90, 0.80, 3.0],
          [0.20, 0.60, 0.60, 0.95, 5.0]],
         [[0.05, 0.30, 0.45, 0.70, 2.0],
          [0.55, 0.55, 0.95, 0.95, 4.0],
          [0.30, 0.05, 0.70, 0.40, 6.0]]], dtype=jnp.float32)
    masks = jnp.zeros((B, 3, H, W), jnp.float32)        # unused (see TODO above)
    num_crowds = jnp.zeros((B,), jnp.int32)             # unused (see TODO above)

    params = make_params(k_par, C)
    priors = make_priors(H, W)

    loss_fn = jax.jit(net_loss_forward)
    losses = loss_fn(images, targets, masks, num_crowds, params, priors)
    losses = jax.tree_util.tree_map(jax.block_until_ready, losses)

    assert bool(jnp.isfinite(losses["B"])) and bool(jnp.isfinite(losses["C"]))
    print("KERNEL_OK")
</pallas_src>

<mosaic_0001>
module attributes {stable_mosaic.version = 11 : i64} {
  func.func @_fused_head_kernel(%arg0: i32, %arg1: memref<256x32xbf16, #tpu.memory_space<vmem>>, %arg2: memref<32x32xbf16, #tpu.memory_space<vmem>>, %arg3: memref<1x32xf32, #tpu.memory_space<vmem>>, %arg4: memref<32x128xbf16, #tpu.memory_space<vmem>>, %arg5: memref<1x128xf32, #tpu.memory_space<vmem>>, %arg6: memref<256x128xf32, #tpu.memory_space<vmem>>) attributes {dimension_semantics = [#tpu.dimension_semantics<parallel>], iteration_bounds = array<i64: 2>, scalar_prefetch = 0 : i64, scratch_operands = 0 : i64, tpu.core_type = #tpu.core_type<tc>, window_params = [{transform_indices = @transform_0, window_bounds = array<i64: 256, 32>}, {pipeline_mode = #tpu.pipeline_mode<synchronous>, transform_indices = @transform_1, window_bounds = array<i64: 32, 32>}, {pipeline_mode = #tpu.pipeline_mode<synchronous>, transform_indices = @transform_2, window_bounds = array<i64: 1, 32>}, {pipeline_mode = #tpu.pipeline_mode<synchronous>, transform_indices = @transform_3, window_bounds = array<i64: 32, 128>}, {pipeline_mode = #tpu.pipeline_mode<synchronous>, transform_indices = @transform_4, window_bounds = array<i64: 1, 128>}, {transform_indices = @transform_5, window_bounds = array<i64: 256, 128>}]} {
    %c0 = arith.constant 0 : index
    %c0_0 = arith.constant 0 : index
    %0 = vector.load %arg1[%c0, %c0_0] : memref<256x32xbf16, #tpu.memory_space<vmem>>, vector<256x32xbf16>
    %c0_1 = arith.constant 0 : index
    %c0_2 = arith.constant 0 : index
    %1 = vector.load %arg2[%c0_1, %c0_2] : memref<32x32xbf16, #tpu.memory_space<vmem>>, vector<32x32xbf16>
    %cst = arith.constant dense<0.000000e+00> : vector<256x32xf32>
    %2 = tpu.matmul %0, %1, %cst {dimension_numbers = #tpu.dot_dimension_numbers<[1], [0], [0], [1], [0, 0, 1, 1], [], []>} : vector<256x32xbf16>, vector<32x32xbf16>, vector<256x32xf32> -> vector<256x32xf32>
    %c0_3 = arith.constant 0 : index
    %c0_4 = arith.constant 0 : index
    %3 = vector.load %arg3[%c0_3, %c0_4] : memref<1x32xf32, #tpu.memory_space<vmem>>, vector<1x32xf32>
    %4 = vector.broadcast %3 : vector<1x32xf32> to vector<256x32xf32>
    %5 = arith.addf %2, %4 : vector<256x32xf32>
    %cst_5 = arith.constant 0.000000e+00 : f32
    %6 = vector.broadcast %cst_5 : f32 to vector<256x32xf32>
    %7 = arith.maximumf %5, %6 : vector<256x32xf32>
    %8 = arith.truncf %7 : vector<256x32xf32> to vector<256x32xbf16>
    %c0_6 = arith.constant 0 : index
    %c0_7 = arith.constant 0 : index
    %9 = vector.load %arg4[%c0_6, %c0_7] : memref<32x128xbf16, #tpu.memory_space<vmem>>, vector<32x128xbf16>
    %cst_8 = arith.constant dense<0.000000e+00> : vector<256x128xf32>
    %10 = tpu.matmul %8, %9, %cst_8 {dimension_numbers = #tpu.dot_dimension_numbers<[1], [0], [0], [1], [0, 0, 1, 1], [], []>} : vector<256x32xbf16>, vector<32x128xbf16>, vector<256x128xf32> -> vector<256x128xf32>
    %c0_9 = arith.constant 0 : index
    %c0_10 = arith.constant 0 : index
    %11 = vector.load %arg5[%c0_9, %c0_10] : memref<1x128xf32, #tpu.memory_space<vmem>>, vector<1x128xf32>
    %12 = vector.broadcast %11 : vector<1x128xf32> to vector<256x128xf32>
    %13 = arith.addf %10, %12 : vector<256x128xf32>
    %c0_11 = arith.constant 0 : index
    %c0_12 = arith.constant 0 : index
    %14 = vector.load %arg6[%c0_11, %c0_12] : memref<256x128xf32, #tpu.memory_space<vmem>>, vector<256x128xf32>
    tpu.vector_store %arg6[%c0_11, %c0_12], %13 {strides = array<i32>} : memref<256x128xf32, #tpu.memory_space<vmem>>, vector<256x128xf32>,
    return
  }
  func.func @transform_0(%arg0: i32) -> (i32, i32) {
    %c0_i32 = arith.constant 0 : i32
    %c0_i32_0 = arith.constant 0 : i32
    return %arg0, %c0_i32 : i32, i32
  }
  func.func @transform_1(%arg0: i32) -> (i32, i32) {
    %c0_i32 = arith.constant 0 : i32
    %c0_i32_0 = arith.constant 0 : i32
    %c0_i32_1 = arith.constant 0 : i32
    return %c0_i32, %c0_i32_0 : i32, i32
  }
  func.func @transform_2(%arg0: i32) -> (i32, i32) {
    %c0_i32 = arith.constant 0 : i32
    %c0_i32_0 = arith.constant 0 : i32
    %c0_i32_1 = arith.constant 0 : i32
    return %c0_i32, %c0_i32_0 : i32, i32
  }
  func.func @transform_3(%arg0: i32) -> (i32, i32) {
    %c0_i32 = arith.constant 0 : i32
    %c0_i32_0 = arith.constant 0 : i32
    %c0_i32_1 = arith.constant 0 : i32
    return %c0_i32, %c0_i32_0 : i32, i32
  }
  func.func @transform_4(%arg0: i32) -> (i32, i32) {
    %c0_i32 = arith.constant 0 : i32
    %c0_i32_0 = arith.constant 0 : i32
    %c0_i32_1 = arith.constant 0 : i32
    return %c0_i32, %c0_i32_0 : i32, i32
  }
  func.func @transform_5(%arg0: i32) -> (i32, i32) {
    %c0_i32 = arith.constant 0 : i32
    %c0_i32_0 = arith.constant 0 : i32
    return %arg0, %c0_i32 : i32, i32
  }
}

module attributes {stable_mosaic.version = 11 : i64} {
  func.func @_multibox_loss_kernel(%arg0: i32, %arg1: memref<4x512xf32, #tpu.memory_space<vmem>>, %arg2: memref<4x512xf32, #tpu.memory_space<vmem>>, %arg3: memref<8x512xf32, #tpu.memory_space<vmem>>, %arg4: memref<1x512xi32, #tpu.memory_space<vmem>>, %arg5: memref<3xf32, #tpu.memory_space<smem>>) attributes {dimension_semantics = [#tpu.dimension_semantics<arbitrary>], iteration_bounds = array<i64: 3>, scalar_prefetch = 0 : i64, scratch_operands = 0 : i64, tpu.core_type = #tpu.core_type<tc>, window_params = [{transform_indices = @transform_0, window_bounds = array<i64: 4, 512>}, {transform_indices = @transform_1, window_bounds = array<i64: 4, 512>}, {transform_indices = @transform_2, window_bounds = array<i64: 8, 512>}, {transform_indices = @transform_3, window_bounds = array<i64: 1, 512>}, {transform_indices = @transform_4, window_bounds = array<i64: 3>}]} {
    %c0_i32 = arith.constant 0 : i32
    %0 = arith.cmpi eq, %arg0, %c0_i32 : i32
    %1 = arith.extui %0 : i1 to i32
    %c0_i32_0 = arith.constant 0 : i32
    %2 = arith.cmpi ne, %1, %c0_i32_0 : i32
    scf.if %2 {
      %cst_23 = arith.constant 0.000000e+00 : f32
      %c0_24 = arith.constant 0 : index
      %66 = memref.load %arg5[%c0_24] : memref<3xf32, #tpu.memory_space<smem>>
      memref.store %cst_23, %arg5[%c0_24] : memref<3xf32, #tpu.memory_space<smem>>
      %cst_25 = arith.constant 0.000000e+00 : f32
      %c1_26 = arith.constant 1 : index
      %67 = memref.load %arg5[%c1_26] : memref<3xf32, #tpu.memory_space<smem>>
      memref.store %cst_25, %arg5[%c1_26] : memref<3xf32, #tpu.memory_space<smem>>
      %cst_27 = arith.constant 0.000000e+00 : f32
      %c2_28 = arith.constant 2 : index
      %68 = memref.load %arg5[%c2_28] : memref<3xf32, #tpu.memory_space<smem>>
      memref.store %cst_27, %arg5[%c2_28] : memref<3xf32, #tpu.memory_space<smem>>
    } else {
    }
    %c0 = arith.constant 0 : index
    %c0_1 = arith.constant 0 : index
    %3 = vector.load %arg4[%c0, %c0_1] : memref<1x512xi32, #tpu.memory_space<vmem>>, vector<1x512xi32>
    %c0_i32_2 = arith.constant 0 : i32
    %4 = vector.broadcast %c0_i32_2 : i32 to vector<1x512xi32>
    %5 = arith.cmpi sgt, %3, %4 : vector<1x512xi32>
    %6 = arith.extui %5 : vector<1x512xi1> to vector<1x512xi32>
    %7 = arith.sitofp %6 : vector<1x512xi32> to vector<1x512xf32>
    %c0_i32_3 = arith.constant 0 : i32
    %8 = vector.broadcast %c0_i32_3 : i32 to vector<1x512xi32>
    %9 = arith.cmpi sge, %3, %8 : vector<1x512xi32>
    %10 = arith.extui %9 : vector<1x512xi1> to vector<1x512xi32>
    %11 = arith.sitofp %10 : vector<1x512xi32> to vector<1x512xf32>
    %c0_4 = arith.constant 0 : index
    %c0_5 = arith.constant 0 : index
    %12 = vector.load %arg1[%c0_4, %c0_5] : memref<4x512xf32, #tpu.memory_space<vmem>>, vector<4x512xf32>
    %c0_6 = arith.constant 0 : index
    %c0_7 = arith.constant 0 : index
    %13 = vector.load %arg2[%c0_6, %c0_7] : memref<4x512xf32, #tpu.memory_space<vmem>>, vector<4x512xf32>
    %14 = arith.subf %12, %13 : vector<4x512xf32>
    %15 = math.absf %14 : vector<4x512xf32>
    %cst = arith.constant 1.000000e+00 : f32
    %16 = vector.broadcast %cst : f32 to vector<4x512xf32>
    %17 = arith.cmpf olt, %15, %16 : vector<4x512xf32>
    %cst_8 = arith.constant 5.000000e-01 : f32
    %18 = vector.broadcast %cst_8 : f32 to vector<4x512xf32>
    %19 = arith.mulf %18, %15 : vector<4x512xf32>
    %20 = arith.mulf %19, %15 : vector<4x512xf32>
    %cst_9 = arith.constant 5.000000e-01 : f32
    %21 = vector.broadcast %cst_9 : f32 to vector<4x512xf32>
    %22 = arith.subf %15, %21 : vector<4x512xf32>
    %23 = arith.select %17, %20, %22 : vector<4x512xi1>, vector<4x512xf32>
    %c0_10 = arith.constant 0 : index
    %c0_11 = arith.constant 0 : index
    %24 = vector.load %arg3[%c0_10, %c0_11] : memref<8x512xf32, #tpu.memory_space<vmem>>, vector<8x512xf32>
    %cst_12 = arith.constant dense<0xFF800000> : vector<512xf32>
    %25 = vector.multi_reduction <maximumf>, %24, %cst_12 [0] : vector<8x512xf32> to vector<512xf32>
    %26 = vector.shape_cast %25 : vector<512xf32> to vector<1x512xf32>
    %27 = vector.broadcast %26 : vector<1x512xf32> to vector<8x512xf32>
    %28 = arith.subf %24, %27 : vector<8x512xf32>
    %29 = math.exp %28 : vector<8x512xf32>
    %cst_13 = arith.constant dense<0.000000e+00> : vector<512xf32>
    %30 = vector.multi_reduction <add>, %29, %cst_13 [0] : vector<8x512xf32> to vector<512xf32>
    %31 = vector.shape_cast %30 : vector<512xf32> to vector<1x512xf32>
    %32 = math.log %31 : vector<1x512xf32>
    %33 = arith.addf %26, %32 : vector<1x512xf32>
    %34 = tpu.iota {dimensions = array<i32: 0>} : vector<8x512xi32>
    %35 = vector.broadcast %3 : vector<1x512xi32> to vector<8x512xi32>
    %36 = arith.cmpi eq, %34, %35 : vector<8x512xi32>
    %cst_14 = arith.constant 0.000000e+00 : f32
    %37 = vector.broadcast %cst_14 : f32 to vector<8x512xf32>
    %38 = arith.select %36, %24, %37 : vector<8x512xi1>, vector<8x512xf32>
    %cst_15 = arith.constant dense<0.000000e+00> : vector<512xf32>
    %39 = vector.multi_reduction <add>, %38, %cst_15 [0] : vector<8x512xf32> to vector<512xf32>
    %40 = vector.shape_cast %39 : vector<512xf32> to vector<1x512xf32>
    %41 = arith.subf %33, %40 : vector<1x512xf32>
    %42 = arith.mulf %41, %11 : vector<1x512xf32>
    %c0_16 = arith.constant 0 : index
    %43 = memref.load %arg5[%c0_16] : memref<3xf32, #tpu.memory_space<smem>>
    %44 = vector.broadcast %7 : vector<1x512xf32> to vector<4x512xf32>
    %45 = arith.mulf %23, %44 : vector<4x512xf32>
    %46 = vector.shape_cast %45 : vector<4x512xf32> to vector<1x4x512xf32>
    %cst_17 = arith.constant dense<0.000000e+00> : vector<1xf32>
    %47 = vector.multi_reduction <add>, %46, %cst_17 [1, 2] : vector<1x4x512xf32> to vector<1xf32>
    %48 = vector.shape_cast %47 : vector<1xf32> to vector<1x1x1xf32>
    %49 = vector.extract %48[0, 0, 0] : f32 from vector<1x1x1xf32>
    %50 = arith.addf %43, %49 : f32
    %c0_18 = arith.constant 0 : index
    %51 = memref.load %arg5[%c0_18] : memref<3xf32, #tpu.memory_space<smem>>
    memref.store %50, %arg5[%c0_18] : memref<3xf32, #tpu.memory_space<smem>>
    %c1 = arith.constant 1 : index
    %52 = memref.load %arg5[%c1] : memref<3xf32, #tpu.memory_space<smem>>
    %53 = vector.shape_cast %42 : vector<1x512xf32> to vector<1x1x512xf32>
    %cst_19 = arith.constant dense<0.000000e+00> : vector<1xf32>
    %54 = vector.multi_reduction <add>, %53, %cst_19 [1, 2] : vector<1x1x512xf32> to vector<1xf32>
    %55 = vector.shape_cast %54 : vector<1xf32> to vector<1x1x1xf32>
    %56 = vector.extract %55[0, 0, 0] : f32 from vector<1x1x1xf32>
    %57 = arith.addf %52, %56 : f32
    %c1_20 = arith.constant 1 : index
    %58 = memref.load %arg5[%c1_20] : memref<3xf32, #tpu.memory_space<smem>>
    memref.store %57, %arg5[%c1_20] : memref<3xf32, #tpu.memory_space<smem>>
    %c2 = arith.constant 2 : index
    %59 = memref.load %arg5[%c2] : memref<3xf32, #tpu.memory_space<smem>>
    %60 = vector.shape_cast %7 : vector<1x512xf32> to vector<1x1x512xf32>
    %cst_21 = arith.constant dense<0.000000e+00> : vector<1xf32>
    %61 = vector.multi_reduction <add>, %60, %cst_21 [1, 2] : vector<1x1x512xf32> to vector<1xf32>
    %62 = vector.shape_cast %61 : vector<1xf32> to vector<1x1x1xf32>
    %63 = vector.extract %62[0, 0, 0] : f32 from vector<1x1x1xf32>
    %64 = arith.addf %59, %63 : f32
    %c2_22 = arith.constant 2 : index
    %65 = memref.load %arg5[%c2_22] : memref<3xf32, #tpu.memory_space<smem>>
    memref.store %64, %arg5[%c2_22] : memref<3xf32, #tpu.memory_space<smem>>
    return
  }
  func.func @transform_0(%arg0: i32) -> (i32, i32) {
    %c0_i32 = arith.constant 0 : i32
    %c0_i32_0 = arith.constant 0 : i32
    return %c0_i32, %arg0 : i32, i32
  }
  func.func @transform_1(%arg0: i32) -> (i32, i32) {
    %c0_i32 = arith.constant 0 : i32
    %c0_i32_0 = arith.constant 0 : i32
    return %c0_i32, %arg0 : i32, i32
  }
  func.func @transform_2(%arg0: i32) -> (i32, i32) {
    %c0_i32 = arith.constant 0 : i32
    %c0_i32_0 = arith.constant 0 : i32
    return %c0_i32, %arg0 : i32, i32
  }
  func.func @transform_3(%arg0: i32) -> (i32, i32) {
    %c0_i32 = arith.constant 0 : i32
    %c0_i32_0 = arith.constant 0 : i32
    return %c0_i32, %arg0 : i32, i32
  }
  func.func @transform_4(%arg0: i32) -> i32 {
    %c0_i32 = arith.constant 0 : i32
    %c0_i32_0 = arith.constant 0 : i32
    return %c0_i32 : i32
  }
}

</mosaic_0001>

<llo_original>
// kernel: net_loss_forward.2
$region0: #{net_loss_forward.2}
  #allocation0 [shape = 'u32[]', space=smem, size = 0x4, offset = 0x4, fixed_abs, tag = 'smem constant byte address 0x4 - core index']
  #allocation1 [shape = 'u32[72,128]{1,0:T(1,128)}', space=vmem, size = 0x9000, scoped, tag = 'internal scratch']
  %s0 = inlined_call_operand.vmem [shape: bf16[512,32], index: 0, kind: input, shape index: {}]
  %s1 = inlined_call_operand.vmem [shape: bf16[32,32], index: 1, kind: input, shape index: {}]
  %s2 = inlined_call_operand.vmem [shape: f32[1,32], index: 2, kind: input, shape index: {}]
  %s3 = inlined_call_operand.vmem [shape: bf16[32,128], index: 3, kind: input, shape index: {}]
  %s4 = inlined_call_operand.vmem [shape: f32[1,128], index: 4, kind: input, shape index: {}]
  %s5 = inlined_call_operand.vmem [shape: f32[512,128], index: 5, kind: output, shape index: {}]
  %s6 = sld [smem:[#allocation0]]
  $region53: #{net_loss_forward.2} parent=0
    _
  %s8 = ssub.s32 1, %s6
  %s9 = scalar_select 0, %s8, %s6
  loop: start=0, step=1, limit=4
  $region2: #{net_loss_forward.2} parent=0 // loop_pre_header
    _
  $region3: #{net_loss_forward.2} parent=0 // loop_header
    %s11 = sphi 0, %s15
    %p12 = scmp.ge.s32.totalorder %s11, 4
    %s21 = sphi 0, %s23
    %s24 = sphi 0, %s21
    %s25 = sphi 0, %s24
    %s41 = sphi 0, %s25
    %s45 = sphi 0, %s45
    %s47 = sphi 0, %s45
    %s48 = sphi 0, %s47
    %s62 = sphi 0, %s48
    %s66 = sphi 0, %s66
    %s68 = sphi 0, %s66
    %s69 = sphi 0, %s68
    %s83 = sphi 0, %s69
    %s87 = sphi 0, %s87
    %s89 = sphi 0, %s87
    %s90 = sphi 0, %s89
    %s104 = sphi 0, %s90
    %s108 = sphi 0, %s108
    %s110 = sphi 0, %s108
    %s111 = sphi 0, %s110
    %s125 = sphi 0, %s111
    %s131 = sphi 0, %s133
    %s134 = sphi 0, %s131
    %s135 = sphi 0, %s134
    %s151 = sphi 0, %s135
  $region4: #{net_loss_forward.2} parent=0 // loop_header_branch
    %14 = sbr.rel (%p12) target = $region8
  $region5: #{net_loss_forward.2} parent=0 // loop_body
    %s16 = ssub.s32 %s11, 1
    %s17 = ssub.s32 %s11, 2
    %s18 = sadd.s32 %s11, 1
    %s19 = ssub.s32 %s11, %s18
    %p20 = scmp.eq.s32.totalorder %s19, 0
    %s22 = sadd.s32 %s21, 1
    %s23 = scalar_select %p20, %s21, %s22
    %p26 = pneg %p20
    %p27 = scmp.eq.s32.totalorder %s11, 1
    %p28 = por %p26, %p27
    %p29 = scmp.ne.s32.totalorder %s21, %s24
    %p30 = scmp.eq.s32.totalorder %s11, 0
    %p31 = por %p29, %p30
    %p32 = scmp.ne.s32.totalorder %s21, %s24
    %p33 = scmp.eq.s32.totalorder %s16, 1
    %p34 = por %p32, %p33
    %p35 = scmp.ne.s32.totalorder %s24, %s25
    %p36 = scmp.eq.s32.totalorder %s16, 0
    %p37 = por %p35, %p36
    %p38 = scmp.ne.s32.totalorder %s24, %s25
    %p39 = scmp.eq.s32.totalorder %s17, 1
    %p40 = por %p38, %p39
    %p42 = scmp.ne.s32.totalorder %s25, %s41
    %p43 = scmp.eq.s32.totalorder %s17, 0
    %p44 = por %p42, %p43
    %s46 = sadd.s32 %s45, 1
    %p49 = scmp.eq.s32.totalorder %s11, 1
    %p50 = scmp.ne.s32.totalorder %s45, %s47
    %p51 = scmp.eq.s32.totalorder %s11, 0
    %p52 = por %p50, %p51
    %p53 = scmp.ne.s32.totalorder %s45, %s47
    %p54 = scmp.eq.s32.totalorder %s16, 1
    %p55 = por %p53, %p54
    %p56 = scmp.ne.s32.totalorder %s47, %s48
    %p57 = scmp.eq.s32.totalorder %s16, 0
    %p58 = por %p56, %p57
    %p59 = scmp.ne.s32.totalorder %s47, %s48
    %p60 = scmp.eq.s32.totalorder %s17, 1
    %p61 = por %p59, %p60
    %p63 = scmp.ne.s32.totalorder %s48, %s62
    %p64 = scmp.eq.s32.totalorder %s17, 0
    %p65 = por %p63, %p64
    %s67 = sadd.s32 %s66, 1
    %p70 = scmp.eq.s32.totalorder %s11, 1
    %p71 = scmp.ne.s32.totalorder %s66, %s68
    %p72 = scmp.eq.s32.totalorder %s11, 0
    %p73 = por %p71, %p72
    %p74 = scmp.ne.s32.totalorder %s66, %s68
    %p75 = scmp.eq.s32.totalorder %s16, 1
    %p76 = por %p74, %p75
    %p77 = scmp.ne.s32.totalorder %s68, %s69
    %p78 = scmp.eq.s32.totalorder %s16, 0
    %p79 = por %p77, %p78
    %p80 = scmp.ne.s32.totalorder %s68, %s69
    %p81 = scmp.eq.s32.totalorder %s17, 1
    %p82 = por %p80, %p81
    %p84 = scmp.ne.s32.totalorder %s69, %s83
    %p85 = scmp.eq.s32.totalorder %s17, 0
    %p86 = por %p84, %p85
    %s88 = sadd.s32 %s87, 1
    %p91 = scmp.eq.s32.totalorder %s11, 1
    %p92 = scmp.ne.s32.totalorder %s87, %s89
    %p93 = scmp.eq.s32.totalorder %s11, 0
    %p94 = por %p92, %p93
    %p95 = scmp.ne.s32.totalorder %s87, %s89
    %p96 = scmp.eq.s32.totalorder %s16, 1
    %p97 = por %p95, %p96
    %p98 = scmp.ne.s32.totalorder %s89, %s90
    %p99 = scmp.eq.s32.totalorder %s16, 0
    %p100 = por %p98, %p99
    %p101 = scmp.ne.s32.totalorder %s89, %s90
    %p102 = scmp.eq.s32.totalorder %s17, 1
    %p103 = por %p101, %p102
    %p105 = scmp.ne.s32.totalorder %s90, %s104
    %p106 = scmp.eq.s32.totalorder %s17, 0
    %p107 = por %p105, %p106
    %s109 = sadd.s32 %s108, 1
    %p112 = scmp.eq.s32.totalorder %s11, 1
    %p113 = scmp.ne.s32.totalorder %s108, %s110
    %p114 = scmp.eq.s32.totalorder %s11, 0
    %p115 = por %p113, %p114
    %p116 = scmp.ne.s32.totalorder %s108, %s110
    %p117 = scmp.eq.s32.totalorder %s16, 1
    %p118 = por %p116, %p117
    %p119 = scmp.ne.s32.totalorder %s110, %s111
    %p120 = scmp.eq.s32.totalorder %s16, 0
    %p121 = por %p119, %p120
    %p122 = scmp.ne.s32.totalorder %s110, %s111
    %p123 = scmp.eq.s32.totalorder %s17, 1
    %p124 = por %p122, %p123
    %p126 = scmp.ne.s32.totalorder %s111, %s125
    %p127 = scmp.eq.s32.totalorder %s17, 0
    %p128 = por %p126, %p127
    %s129 = ssub.s32 %s11, %s18
    %p130 = scmp.eq.s32.totalorder %s129, 0
    %s132 = sadd.s32 %s131, 1
    %s133 = scalar_select %p130, %s131, %s132
    %p136 = pneg %p130
    %p137 = scmp.eq.s32.totalorder %s11, 1
    %p138 = por %p136, %p137
    %p139 = scmp.ne.s32.totalorder %s131, %s134
    %p140 = scmp.eq.s32.totalorder %s11, 0
    %p141 = por %p139, %p140
    %p142 = scmp.ne.s32.totalorder %s131, %s134
    %p143 = scmp.eq.s32.totalorder %s16, 1
    %p144 = por %p142, %p143
    %p145 = scmp.ne.s32.totalorder %s134, %s135
    %p146 = scmp.eq.s32.totalorder %s16, 0
    %p147 = por %p145, %p146
    %p148 = scmp.ne.s32.totalorder %s134, %s135
    %p149 = scmp.eq.s32.totalorder %s17, 1
    %p150 = por %p148, %p149
    %p152 = scmp.ne.s32.totalorder %s135, %s151
    %p153 = scmp.eq.s32.totalorder %s17, 0
    %p154 = por %p152, %p153
    %p155 = scmp.le.s32.totalorder 1, %s11
    %p156 = scmp.lt.s32.totalorder %s11, 3
    %p157 = pnand %p155, %p156
    %p158 = pneg %p157
    // Predicated region
    $region9: #{net_loss_forward.2} parent=5 // pred_check
      _
    $region10: #{net_loss_forward.2} parent=5 // pred_check_branch
      %160 = sbr.rel (%p157) target = $region12
    $region11: #{net_loss_forward.2} parent=5 // pred_region
      %s161 = ssub.s32 %s11, 1
      // Predicated region
      $region13: #{net_loss_forward.2} parent=11 // pred_check
        %p162 = pneg %p58
      $region14: #{net_loss_forward.2} parent=11 // pred_check_branch
        %164 = sbr.rel (%p162) target = $region16
      $region15: #{net_loss_forward.2} parent=11 // pred_region
        _
      $region16: #{net_loss_forward.2} parent=11 // pred_fallthru
        _
      // Predicated region
      $region17: #{net_loss_forward.2} parent=11 // pred_check
        %p165 = pneg %p79
      $region18: #{net_loss_forward.2} parent=11 // pred_check_branch
        %167 = sbr.rel (%p165) target = $region20
      $region19: #{net_loss_forward.2} parent=11 // pred_region
        _
      $region20: #{net_loss_forward.2} parent=11 // pred_fallthru
        _
      // Predicated region
      $region21: #{net_loss_forward.2} parent=11 // pred_check
        %p168 = pneg %p100
      $region22: #{net_loss_forward.2} parent=11 // pred_check_branch
        %170 = sbr.rel (%p168) target = $region24
      $region23: #{net_loss_forward.2} parent=11 // pred_region
        _
      $region24: #{net_loss_forward.2} parent=11 // pred_fallthru
        _
      // Predicated region
      $region25: #{net_loss_forward.2} parent=11 // pred_check
        %p171 = pneg %p121
      $region26: #{net_loss_forward.2} parent=11 // pred_check_branch
        %173 = sbr.rel (%p171) target = $region28
      $region27: #{net_loss_forward.2} parent=11 // pred_region
        _
      $region28: #{net_loss_forward.2} parent=11 // pred_fallthru
        _
    $region12: #{net_loss_forward.2} parent=5 // pred_fallthru
      _
    %p174 = scmp.lt.s32.totalorder %s11, 2
    // Predicated region
    $region29: #{net_loss_forward.2} parent=5 // pred_check
      %p175 = pneg %p174
    $region30: #{net_loss_forward.2} parent=5 // pred_check_branch
      %177 = sbr.rel (%p175) target = $region32
    $region31: #{net_loss_forward.2} parent=5 // pred_region
      // Predicated region
      $region33: #{net_loss_forward.2} parent=31 // pred_check
        %p178 = pneg %p31
      $region34: #{net_loss_forward.2} parent=31 // pred_check_branch
        %180 = sbr.rel (%p178) target = $region36
      $region35: #{net_loss_forward.2} parent=31 // pred_region
        %s181 = smul.u32 32, %s11
        %p182 = scmp.lt.s32.totalorder %s181, 63
        %s183 = scalar_select %p182, %s181, 63
        %s184 = smul.addr %s183, 4
        %s185 = scalar_lea.vmem %s0, %s184
        %s186 = smul.u32 32, %s11
      $region36: #{net_loss_forward.2} parent=31 // pred_fallthru
        _
    $region32: #{net_loss_forward.2} parent=5 // pred_fallthru
      _
    %p187 = scmp.le.s32.totalorder 1, %s11
    %p188 = scmp.lt.s32.totalorder %s11, 3
    %p189 = pnand %p187, %p188
    %p190 = pneg %p189
    // Predicated region
    $region37: #{net_loss_forward.2} parent=5 // pred_check
      _
    $region38: #{net_loss_forward.2} parent=5 // pred_check_branch
      %192 = sbr.rel (%p189) target = $region40
    $region39: #{net_loss_forward.2} parent=5 // pred_region
      %s193 = ssub.s32 %s11, 1
      %s194 = smul.u32 32, %s16
      %p195 = scmp.lt.s32.totalorder %s194, 63
      %s196 = scalar_select %p195, %s194, 63
      %s197 = smul.addr %s196, 4
      %s198 = scalar_lea.vmem %s0, %s197
      %p199 = pneg %p37
      %p200 = pneg %p34
      %p201 = pneg %p58
      %p202 = pneg %p55
      %p203 = pneg %p79
      %p204 = pneg %p76
      %p205 = pneg %p100
      %p206 = pneg %p97
      %p207 = pneg %p121
      %p208 = pneg %p118
      %p209 = pneg %p147
      %p210 = pneg %p144
      %s211 = smul.u32 32, %s16
      %p212 = scmp.lt.s32.totalorder %s211, 63
      %s213 = scalar_select %p212, %s211, 63
      %s214 = smul.addr %s213, 8
      %s215 = scalar_lea.vmem %s5, %s214
      %s216 = smul.u32 32, %s16
      %p217 = scmp.lt.s32.totalorder %s216, 63
      %s218 = scalar_select %p217, %s216, 63
      %s219 = smul.addr %s218, 4
      %s220 = scalar_lea.vmem %s0, %s219
      %s221 = smul.u32 32, %s16
      %s222 = smul.u32 32, %s16
      %p223 = scmp.lt.s32.totalorder %s222, 63
      %s224 = scalar_select %p223, %s222, 63
      %s225 = smul.addr %s224, 8
      %s226 = scalar_lea.vmem %s5, %s225
      %s227 = smul.u32 32, %s16
      %v229 = vld [vmem:[%s220] sm:$0xf]
      %v230 = vld [vmem:[%s220 + $0x4] sm:$0xf]
      %v231 = vld [vmem:[%s220 + $0x8] sm:$0xf]
      %v232 = vld [vmem:[%s220 + $0xc] sm:$0xf]
      %v233 = vld [vmem:[%s220 + $0x10] sm:$0xf]
      %v234 = vld [vmem:[%s220 + $0x14] sm:$0xf]
      %v235 = vld [vmem:[%s220 + $0x18] sm:$0xf]
      %v236 = vld [vmem:[%s220 + $0x1c] sm:$0xf]
      %v237 = vld [vmem:[%s220 + $0x20] sm:$0xf]
      %v238 = vld [vmem:[%s220 + $0x24] sm:$0xf]
      %v239 = vld [vmem:[%s220 + $0x28] sm:$0xf]
      %v240 = vld [vmem:[%s220 + $0x2c] sm:$0xf]
      %v241 = vld [vmem:[%s220 + $0x30] sm:$0xf]
      %v242 = vld [vmem:[%s220 + $0x34] sm:$0xf]
      %v243 = vld [vmem:[%s220 + $0x38] sm:$0xf]
      %v244 = vld [vmem:[%s220 + $0x3c] sm:$0xf]
      %v245 = vld [vmem:[%s220 + $0x40] sm:$0xf]
      %v246 = vld [vmem:[%s220 + $0x44] sm:$0xf]
      %v247 = vld [vmem:[%s220 + $0x48] sm:$0xf]
      %v248 = vld [vmem:[%s220 + $0x4c] sm:$0xf]
      %v249 = vld [vmem:[%s220 + $0x50] sm:$0xf]
      %v250 = vld [vmem:[%s220 + $0x54] sm:$0xf]
      %v251 = vld [vmem:[%s220 + $0x58] sm:$0xf]
      %v252 = vld [vmem:[%s220 + $0x5c] sm:$0xf]
      %v253 = vld [vmem:[%s220 + $0x60] sm:$0xf]
      %v254 = vld [vmem:[%s220 + $0x64] sm:$0xf]
      %v255 = vld [vmem:[%s220 + $0x68] sm:$0xf]
      %v256 = vld [vmem:[%s220 + $0x6c] sm:$0xf]
      %v257 = vld [vmem:[%s220 + $0x70] sm:$0xf]
      %v258 = vld [vmem:[%s220 + $0x74] sm:$0xf]
      %v259 = vld [vmem:[%s220 + $0x78] sm:$0xf]
      %v260 = vld [vmem:[%s220 + $0x7c] sm:$0xf]
      %v261 = vld [vmem:[%s1] sm:$0xf]
      %v262 = vld [vmem:[%s1 + $0x4] sm:$0xf]
      %v263 = vld [vmem:[%s1 + $0x8] sm:$0xf]
      %v264 = vld [vmem:[%s1 + $0xc] sm:$0xf]
      %v265 = vld [vmem:[%s2] sm:$0x1]
      %v267 = vperm.slane %v265, 0
      %v301 = vunpack.c.l.b16 %v229
      %v302 = vunpack.c.l.b16 %v230
      %v303 = vunpack.c.l.b16 %v231
      %v304 = vunpack.c.l.b16 %v232
      %v305 = vunpack.c.l.b16 %v233
      %v306 = vunpack.c.l.b16 %v234
      %v307 = vunpack.c.l.b16 %v235
      %v308 = vunpack.c.l.b16 %v236
      %v309 = vunpack.c.l.b16 %v237
      %v310 = vunpack.c.l.b16 %v238
      %v311 = vunpack.c.l.b16 %v239
      %v312 = vunpack.c.l.b16 %v240
      %v313 = vunpack.c.l.b16 %v241
      %v314 = vunpack.c.l.b16 %v242
      %v315 = vunpack.c.l.b16 %v243
      %v316 = vunpack.c.l.b16 %v244
      %v317 = vunpack.c.l.b16 %v245
      %v318 = vunpack.c.l.b16 %v246
      %v319 = vunpack.c.l.b16 %v247
      %v320 = vunpack.c.l.b16 %v248
      %v321 = vunpack.c.l.b16 %v249
      %v322 = vunpack.c.l.b16 %v250
      %v323 = vunpack.c.l.b16 %v251
      %v324 = vunpack.c.l.b16 %v252
      %v325 = vunpack.c.l.b16 %v253
      %v326 = vunpack.c.l.b16 %v254
      %v327 = vunpack.c.l.b16 %v255
      %v328 = vunpack.c.l.b16 %v256
      %v329 = vunpack.c.l.b16 %v257
      %v330 = vunpack.c.l.b16 %v258
      %v331 = vunpack.c.l.b16 %v259
      %v332 = vunpack.c.l.b16 %v260
      %v333 = vpack.c.b16 %v302, %v301
      %v334 = vpack.c.b16 %v304, %v303
      %v335 = vpack.c.b16 %v306, %v305
      %v336 = vpack.c.b16 %v308, %v307
      %v337 = vpack.c.b16 %v310, %v309
      %v338 = vpack.c.b16 %v312, %v311
      %v339 = vpack.c.b16 %v314, %v313
      %v340 = vpack.c.b16 %v316, %v315
      %v341 = vpack.c.b16 %v318, %v317
      %v342 = vpack.c.b16 %v320, %v319
      %v343 = vpack.c.b16 %v322, %v321
      %v344 = vpack.c.b16 %v324, %v323
      %v345 = vpack.c.b16 %v326, %v325
      %v346 = vpack.c.b16 %v328, %v327
      %v347 = vpack.c.b16 %v330, %v329
      %v348 = vpack.c.b16 %v332, %v331
      %v353 = vunpack.c.l.b16 %v261
      %v354 = vunpack.c.l.b16 %v262
      %v355 = vunpack.c.l.b16 %v263
      %v356 = vunpack.c.l.b16 %v264
      %v357 = vpack.c.b16 %v354, %v353
      %v358 = vpack.c.b16 %v356, %v355
      %vm361 = vcmask 261120
      %v363 = vsel %vm361, %v333, 0
      %v366 = vsel %vm361, %v334, 0
      %v369 = vsel %vm361, %v335, 0
      %v372 = vsel %vm361, %v336, 0
      %v375 = vsel %vm361, %v337, 0
      %v378 = vsel %vm361, %v338, 0
      %v381 = vsel %vm361, %v339, 0
      %v384 = vsel %vm361, %v340, 0
      %v387 = vsel %vm361, %v341, 0
      %v390 = vsel %vm361, %v342, 0
      %v393 = vsel %vm361, %v343, 0
      %v396 = vsel %vm361, %v344, 0
      %v399 = vsel %vm361, %v345, 0
      %v402 = vsel %vm361, %v346, 0
      %v405 = vsel %vm361, %v347, 0
      %v408 = vsel %vm361, %v348, 0
      %410 = vmatpush.bf16.msra.mxu0 0
      %411 = vmatpush.bf16.msra.mxu0 0
      %412 = vmatpush.bf16.msra.mxu0 0
      %413 = vmatpush.bf16.msra.mxu0 0
      %414 = vmatpush.bf16.msra.mxu0 0
      %415 = vmatpush.bf16.msra.mxu0 0
      %416 = vmatpush.bf16.msra.mxu0 %v358
      %417 = vmatpush.bf16.msra.mxu0 %v357
      %418 = vmatmul.bf16.gmra.mxu0 %v363
      %v419 = vpop.f32.mrf.mxu0
      %v420 = vadd.f32 %v267, %v419
      %v421 = vpop.f32.mrf.mxu0
      %v422 = vadd.f32 %v267, %v421
      %423 = vmatmul.bf16.gmra.mxu0 %v366
      %v424 = vpop.f32.mrf.mxu0
      %v425 = vadd.f32 %v267, %v424
      %v426 = vpop.f32.mrf.mxu0
      %v427 = vadd.f32 %v267, %v426
      %428 = vmatmul.bf16.gmra.mxu0 %v369
      %v429 = vpop.f32.mrf.mxu0
      %v430 = vadd.f32 %v267, %v429
      %v431 = vpop.f32.mrf.mxu0
      %v432 = vadd.f32 %v267, %v431
      %433 = vmatmul.bf16.gmra.mxu0 %v372
      %v434 = vpop.f32.mrf.mxu0
      %v435 = vadd.f32 %v267, %v434
      %v436 = vpop.f32.mrf.mxu0
      %v437 = vadd.f32 %v267, %v436
      %438 = vmatmul.bf16.gmra.mxu0 %v375
      %v439 = vpop.f32.mrf.mxu0
      %v440 = vadd.f32 %v267, %v439
      %v441 = vpop.f32.mrf.mxu0
      %v442 = vadd.f32 %v267, %v441
      %443 = vmatmul.bf16.gmra.mxu0 %v378
      %v444 = vpop.f32.mrf.mxu0
      %v445 = vadd.f32 %v267, %v444
      %v446 = vpop.f32.mrf.mxu0
      %v447 = vadd.f32 %v267, %v446
      %448 = vmatmul.bf16.gmra.mxu0 %v381
      %v449 = vpop.f32.mrf.mxu0
      %v450 = vadd.f32 %v267, %v449
      %v451 = vpop.f32.mrf.mxu0
      %v452 = vadd.f32 %v267, %v451
      %453 = vmatmul.bf16.gmra.mxu0 %v384
      %v454 = vpop.f32.mrf.mxu0
      %v455 = vadd.f32 %v267, %v454
      %v456 = vpop.f32.mrf.mxu0
      %v457 = vadd.f32 %v267, %v456
      %458 = vmatmul.bf16.gmra.mxu0 %v387
      %v459 = vpop.f32.mrf.mxu0
      %v460 = vadd.f32 %v267, %v459
      %v461 = vpop.f32.mrf.mxu0
      %v462 = vadd.f32 %v267, %v461
      %463 = vmatmul.bf16.gmra.mxu0 %v390
      %v464 = vpop.f32.mrf.mxu0
      %v465 = vadd.f32 %v267, %v464
      %v466 = vpop.f32.mrf.mxu0
      %v467 = vadd.f32 %v267, %v466
      %468 = vmatmul.bf16.gmra.mxu0 %v393
      %v469 = vpop.f32.mrf.mxu0
      %v470 = vadd.f32 %v267, %v469
      %v471 = vpop.f32.mrf.mxu0
      %v472 = vadd.f32 %v267, %v471
      %473 = vmatmul.bf16.gmra.mxu0 %v396
      %v474 = vpop.f32.mrf.mxu0
      %v475 = vadd.f32 %v267, %v474
      %v476 = vpop.f32.mrf.mxu0
      %v477 = vadd.f32 %v267, %v476
      %478 = vmatmul.bf16.gmra.mxu0 %v399
      %v479 = vpop.f32.mrf.mxu0
      %v480 = vadd.f32 %v267, %v479
      %v481 = vpop.f32.mrf.mxu0
      %v482 = vadd.f32 %v267, %v481
      %483 = vmatmul.bf16.gmra.mxu0 %v402
      %v484 = vpop.f32.mrf.mxu0
      %v485 = vadd.f32 %v267, %v484
      %v486 = vpop.f32.mrf.mxu0
      %v487 = vadd.f32 %v267, %v486
      %488 = vmatmul.bf16.gmra.mxu0 %v405
      %v489 = vpop.f32.mrf.mxu0
      %v490 = vadd.f32 %v267, %v489
      %v491 = vpop.f32.mrf.mxu0
      %v492 = vadd.f32 %v267, %v491
      %493 = vmatmul.bf16.gmra.mxu0 %v408
      %v494 = vpop.f32.mrf.mxu0
      %v495 = vadd.f32 %v267, %v494
      %v496 = vpop.f32.mrf.mxu0
      %v497 = vadd.f32 %v267, %v496
      %498 = vdwg.mxu0
      %v499 = vmax.f32 %v420, 0.0
      %v500 = vmax.f32 %v422, 0.0
      %v501 = vmax.f32 %v425, 0.0
      %v502 = vmax.f32 %v427, 0.0
      %v503 = vmax.f32 %v430, 0.0
      %v504 = vmax.f32 %v432, 0.0
      %v505 = vmax.f32 %v435, 0.0
      %v506 = vmax.f32 %v437, 0.0
      %v507 = vmax.f32 %v440, 0.0
      %v508 = vmax.f32 %v442, 0.0
      %v509 = vmax.f32 %v445, 0.0
      %v510 = vmax.f32 %v447, 0.0
      %v511 = vmax.f32 %v450, 0.0
      %v512 = vmax.f32 %v452, 0.0
      %v513 = vmax.f32 %v455, 0.0
      %v514 = vmax.f32 %v457, 0.0
      %v515 = vmax.f32 %v460, 0.0
      %v516 = vmax.f32 %v462, 0.0
      %v517 = vmax.f32 %v465, 0.0
      %v518 = vmax.f32 %v467, 0.0
      %v519 = vmax.f32 %v470, 0.0
      %v520 = vmax.f32 %v472, 0.0
      %v521 = vmax.f32 %v475, 0.0
      %v522 = vmax.f32 %v477, 0.0
      %v523 = vmax.f32 %v480, 0.0
      %v524 = vmax.f32 %v482, 0.0
      %v525 = vmax.f32 %v485, 0.0
      %v526 = vmax.f32 %v487, 0.0
      %v527 = vmax.f32 %v490, 0.0
      %v528 = vmax.f32 %v492, 0.0
      %v529 = vmax.f32 %v495, 0.0
      %v530 = vmax.f32 %v497, 0.0
      %v531 = vpack.c.bf16 %v500, %v499
      %v532 = vpack.c.bf16 %v502, %v501
      %v533 = vpack.c.bf16 %v504, %v503
      %v534 = vpack.c.bf16 %v506, %v505
      %v535 = vpack.c.bf16 %v508, %v507
      %v536 = vpack.c.bf16 %v510, %v509
      %v537 = vpack.c.bf16 %v512, %v511
      %v538 = vpack.c.bf16 %v514, %v513
      %v539 = vpack.c.bf16 %v516, %v515
      %v540 = vpack.c.bf16 %v518, %v517
      %v541 = vpack.c.bf16 %v520, %v519
      %v542 = vpack.c.bf16 %v522, %v521
      %v543 = vpack.c.bf16 %v524, %v523
      %v544 = vpack.c.bf16 %v526, %v525
      %v545 = vpack.c.bf16 %v528, %v527
      %v546 = vpack.c.bf16 %v530, %v529
      %v547 = vld [vmem:[%s3] sm:$0xf]
      %v548 = vld [vmem:[%s3 + $0x4] sm:$0xf]
      %v549 = vld [vmem:[%s3 + $0x8] sm:$0xf]
      %v550 = vld [vmem:[%s3 + $0xc] sm:$0xf]
      %v551 = vld [vmem:[%s4] sm:$0x1]
      %v553 = vperm.slane %v551, 0
      %v559 = vunpack.c.l.b16 %v547
      %v560 = vunpack.c.l.b16 %v548
      %v561 = vunpack.c.l.b16 %v549
      %v562 = vunpack.c.l.b16 %v550
      %v563 = vpack.c.b16 %v560, %v559
      %v564 = vpack.c.b16 %v562, %v561
      %v568 = vsel %vm361, %v531, 0
      %v571 = vsel %vm361, %v532, 0
      %v574 = vsel %vm361, %v533, 0
      %v577 = vsel %vm361, %v534, 0
      %v580 = vsel %vm361, %v535, 0
      %v583 = vsel %vm361, %v536, 0
      %v586 = vsel %vm361, %v537, 0
      %v589 = vsel %vm361, %v538, 0
      %v592 = vsel %vm361, %v539, 0
      %v595 = vsel %vm361, %v540, 0
      %v598 = vsel %vm361, %v541, 0
      %v601 = vsel %vm361, %v542, 0
      %v604 = vsel %vm361, %v543, 0
      %v607 = vsel %vm361, %v544, 0
      %v610 = vsel %vm361, %v545, 0
      %v613 = vsel %vm361, %v546, 0
      %615 = vmatpush.bf16.msra.mxu0 0
      %616 = vmatpush.bf16.msra.mxu0 0
      %617 = vmatpush.bf16.msra.mxu0 0
      %618 = vmatpush.bf16.msra.mxu0 0
      %619 = vmatpush.bf16.msra.mxu0 0
      %620 = vmatpush.bf16.msra.mxu0 0
      %621 = vmatpush.bf16.msra.mxu0 %v564
      %622 = vmatpush.bf16.msra.mxu0 %v563
      %623 = vmatmul.bf16.gmra.mxu0 %v568
      %v624 = vpop.f32.mrf.mxu0
      %v625 = vadd.f32 %v553, %v624
      %v626 = vpop.f32.mrf.mxu0
      %v627 = vadd.f32 %v553, %v626
      %628 = vmatmul.bf16.gmra.mxu0 %v571
      %v629 = vpop.f32.mrf.mxu0
      %v630 = vadd.f32 %v553, %v629
      %v631 = vpop.f32.mrf.mxu0
      %v632 = vadd.f32 %v553, %v631
      %633 = vmatmul.bf16.gmra.mxu0 %v574
      %v634 = vpop.f32.mrf.mxu0
      %v635 = vadd.f32 %v553, %v634
      %v636 = vpop.f32.mrf.mxu0
      %v637 = vadd.f32 %v553, %v636
      %638 = vmatmul.bf16.gmra.mxu0 %v577
      %v639 = vpop.f32.mrf.mxu0
      %v640 = vadd.f32 %v553, %v639
      %v641 = vpop.f32.mrf.mxu0
      %v642 = vadd.f32 %v553, %v641
      %643 = vmatmul.bf16.gmra.mxu0 %v580
      %v644 = vpop.f32.mrf.mxu0
      %v645 = vadd.f32 %v553, %v644
      %v646 = vpop.f32.mrf.mxu0
      %v647 = vadd.f32 %v553, %v646
      %648 = vmatmul.bf16.gmra.mxu0 %v583
      %v649 = vpop.f32.mrf.mxu0
      %v650 = vadd.f32 %v553, %v649
      %v651 = vpop.f32.mrf.mxu0
      %v652 = vadd.f32 %v553, %v651
      %653 = vmatmul.bf16.gmra.mxu0 %v586
      %v654 = vpop.f32.mrf.mxu0
      %v655 = vadd.f32 %v553, %v654
      %v656 = vpop.f32.mrf.mxu0
      %v657 = vadd.f32 %v553, %v656
      %658 = vmatmul.bf16.gmra.mxu0 %v589
      %v659 = vpop.f32.mrf.mxu0
      %v660 = vadd.f32 %v553, %v659
      %v661 = vpop.f32.mrf.mxu0
      %v662 = vadd.f32 %v553, %v661
      %663 = vmatmul.bf16.gmra.mxu0 %v592
      %v664 = vpop.f32.mrf.mxu0
      %v665 = vadd.f32 %v553, %v664
      %v666 = vpop.f32.mrf.mxu0
      %v667 = vadd.f32 %v553, %v666
      %668 = vmatmul.bf16.gmra.mxu0 %v595
      %v669 = vpop.f32.mrf.mxu0
      %v670 = vadd.f32 %v553, %v669
      %v671 = vpop.f32.mrf.mxu0
      %v672 = vadd.f32 %v553, %v671
      %673 = vmatmul.bf16.gmra.mxu0 %v598
      %v674 = vpop.f32.mrf.mxu0
      %v675 = vadd.f32 %v553, %v674
      %v676 = vpop.f32.mrf.mxu0
      %v677 = vadd.f32 %v553, %v676
      %678 = vmatmul.bf16.gmra.mxu0 %v601
      %v679 = vpop.f32.mrf.mxu0
      %v680 = vadd.f32 %v553, %v679
      %v681 = vpop.f32.mrf.mxu0
      %v682 = vadd.f32 %v553, %v681
      %683 = vmatmul.bf16.gmra.mxu0 %v604
      %v684 = vpop.f32.mrf.mxu0
      %v685 = vadd.f32 %v553, %v684
      %v686 = vpop.f32.mrf.mxu0
      %v687 = vadd.f32 %v553, %v686
      %688 = vmatmul.bf16.gmra.mxu0 %v607
      %v689 = vpop.f32.mrf.mxu0
      %v690 = vadd.f32 %v553, %v689
      %v691 = vpop.f32.mrf.mxu0
      %v692 = vadd.f32 %v553, %v691
      %693 = vmatmul.bf16.gmra.mxu0 %v610
      %v694 = vpop.f32.mrf.mxu0
      %v695 = vadd.f32 %v553, %v694
      %v696 = vpop.f32.mrf.mxu0
      %v697 = vadd.f32 %v553, %v696
      %698 = vmatmul.bf16.gmra.mxu0 %v613
      %v699 = vpop.f32.mrf.mxu0
      %v700 = vadd.f32 %v553, %v699
      %v701 = vpop.f32.mrf.mxu0
      %v702 = vadd.f32 %v553, %v701
      %703 = vdwg.mxu0
      %704 = vst [vmem:[%s226] sm:$0xff] %v625
      %705 = vst [vmem:[%s226 + $0x8] sm:$0xff] %v627
      %706 = vst [vmem:[%s226 + $0x10] sm:$0xff] %v630
      %707 = vst [vmem:[%s226 + $0x18] sm:$0xff] %v632
      %708 = vst [vmem:[%s226 + $0x20] sm:$0xff] %v635
      %709 = vst [vmem:[%s226 + $0x28] sm:$0xff] %v637
      %710 = vst [vmem:[%s226 + $0x30] sm:$0xff] %v640
      %711 = vst [vmem:[%s226 + $0x38] sm:$0xff] %v642
      %712 = vst [vmem:[%s226 + $0x40] sm:$0xff] %v645
      %713 = vst [vmem:[%s226 + $0x48] sm:$0xff] %v647
      %714 = vst [vmem:[%s226 + $0x50] sm:$0xff] %v650
      %715 = vst [vmem:[%s226 + $0x58] sm:$0xff] %v652
      %716 = vst [vmem:[%s226 + $0x60] sm:$0xff] %v655
      %717 = vst [vmem:[%s226 + $0x68] sm:$0xff] %v657
      %718 = vst [vmem:[%s226 + $0x70] sm:$0xff] %v660
      %719 = vst [vmem:[%s226 + $0x78] sm:$0xff] %v662
      %720 = vst [vmem:[%s226 + $0x80] sm:$0xff] %v665
      %721 = vst [vmem:[%s226 + $0x88] sm:$0xff] %v667
      %722 = vst [vmem:[%s226 + $0x90] sm:$0xff] %v670
      %723 = vst [vmem:[%s226 + $0x98] sm:$0xff] %v672
      %724 = vst [vmem:[%s226 + $0xa0] sm:$0xff] %v675
      %725 = vst [vmem:[%s226 + $0xa8] sm:$0xff] %v677
      %726 = vst [vmem:[%s226 + $0xb0] sm:$0xff] %v680
      %727 = vst [vmem:[%s226 + $0xb8] sm:$0xff] %v682
      %728 = vst [vmem:[%s226 + $0xc0] sm:$0xff] %v685
      %729 = vst [vmem:[%s226 + $0xc8] sm:$0xff] %v687
      %730 = vst [vmem:[%s226 + $0xd0] sm:$0xff] %v690
      %731 = vst [vmem:[%s226 + $0xd8] sm:$0xff] %v692
      %732 = vst [vmem:[%s226 + $0xe0] sm:$0xff] %v695
      %733 = vst [vmem:[%s226 + $0xe8] sm:$0xff] %v697
      %734 = vst [vmem:[%s226 + $0xf0] sm:$0xff] %v700
      %735 = vst [vmem:[%s226 + $0xf8] sm:$0xff] %v702
      %s736 = smul.u32 32, %s16
      %p737 = scmp.lt.s32.totalorder %s736, 63
      %s738 = scalar_select %p737, %s736, 63
      %s739 = smul.addr %s738, 8
      %s740 = scalar_lea.vmem %s5, %s739
      // Predicated region
      $region41: #{net_loss_forward.2} parent=39 // pred_check
        %p741 = pneg %p144
      $region42: #{net_loss_forward.2} parent=39 // pred_check_branch
        %743 = sbr.rel (%p741) target = $region44
      $region43: #{net_loss_forward.2} parent=39 // pred_region
        %s744 = smul.u32 32, %s16
      $region44: #{net_loss_forward.2} parent=39 // pred_fallthru
        _
    $region40: #{net_loss_forward.2} parent=5 // pred_fallthru
      _
    %p745 = scmp.le.s32.totalorder 2, %s11
    // Predicated region
    $region45: #{net_loss_forward.2} parent=5 // pred_check
      %p746 = pneg %p745
    $region46: #{net_loss_forward.2} parent=5 // pred_check_branch
      %748 = sbr.rel (%p746) target = $region48
    $region47: #{net_loss_forward.2} parent=5 // pred_region
      %s749 = ssub.s32 %s11, 2
      // Predicated region
      $region49: #{net_loss_forward.2} parent=47 // pred_check
        %p750 = pneg %p150
      $region50: #{net_loss_forward.2} parent=47 // pred_check_branch
        %752 = sbr.rel (%p750) target = $region52
      $region51: #{net_loss_forward.2} parent=47 // pred_region
        %s753 = smul.u32 32, %s17
        %p754 = scmp.lt.s32.totalorder %s753, 63
        %s755 = scalar_select %p754, %s753, 63
        %s756 = smul.addr %s755, 8
        %s757 = scalar_lea.vmem %s5, %s756
      $region52: #{net_loss_forward.2} parent=47 // pred_fallthru
        _
    $region48: #{net_loss_forward.2} parent=5 // pred_fallthru
      _
  $region6: #{net_loss_forward.2} parent=0 // loop_footer
    %s15 = sadd.s32 1, %s11
  $region7: #{net_loss_forward.2} parent=0 // loop_footer_branch
    %10 = sbr.rel target = $region3
  $region8: #{net_loss_forward.2} parent=0 // loop_exit
    _

// kernel: net_loss_forward.3
$region0: #{net_loss_forward.3}
  #allocation0 [shape = 'u32[]', space=smem, size = 0x4, offset = 0x4, fixed_abs, tag = 'smem constant byte address 0x4 - core index']
  #allocation1 [shape = 'u32[72,128]{1,0:T(1,128)}', space=vmem, size = 0x9000, scoped, tag = 'internal scratch']
  %s0 = inlined_call_operand.vmem [shape: f32[4,1536], index: 0, kind: input, shape index: {}]
  %s1 = inlined_call_operand.vmem [shape: f32[4,1536], index: 1, kind: input, shape index: {}]
  %s2 = inlined_call_operand.vmem [shape: f32[8,1536], index: 2, kind: input, shape index: {}]
  %s3 = inlined_call_operand.vmem [shape: s32[1,1536], index: 3, kind: input, shape index: {}]
  %s4 = inlined_call_operand.vmem [shape: f32[3], index: 4, kind: output, shape index: {}]
  %s5 = sld [smem:[#allocation0]]
  $region53: #{net_loss_forward.3} parent=0
    _
  %s7 = ssub.s32 1, %s5
  %s8 = scalar_select 0, %s7, %s5
  $region1: #{net_loss_forward.3} parent=0
    #allocation2 [shape = 'u8[512]{0}', space=smem, size = 0x200, scoped, tag = 'output window, operand 0, single buffered']
    #allocation3 [shape = 's32[2]{0}', space=sflag, size = 0x8, scoped, tag = 'scoped memory for net_loss_forward.3']
    %9 = vsyncpa [#allocation3], 0
    loop: start=0, step=1, limit=5
    $region2: #{net_loss_forward.3} parent=1 // loop_pre_header
      _
    $region3: #{net_loss_forward.3} parent=1 // loop_header
      %s11 = sphi 0, %s15
      %p12 = scmp.ge.s32.totalorder %s11, 5
      %s21 = sphi 0, %s23
      %s24 = sphi 0, %s21
      %s25 = sphi 0, %s24
      %s41 = sphi 0, %s25
      %s47 = sphi 0, %s49
      %s50 = sphi 0, %s47
      %s51 = sphi 0, %s50
      %s67 = sphi 0, %s51
      %s73 = sphi 0, %s75
      %s76 = sphi 0, %s73
      %s77 = sphi 0, %s76
      %s93 = sphi 0, %s77
      %s99 = sphi 0, %s101
      %s102 = sphi 0, %s99
      %s103 = sphi 0, %s102
      %s119 = sphi 0, %s103
      %s123 = sphi 0, %s123
      %s125 = sphi 0, %s123
      %s126 = sphi 0, %s125
      %s140 = sphi 0, %s126
    $region4: #{net_loss_forward.3} parent=1 // loop_header_branch
      %14 = sbr.rel (%p12) target = $region8
    $region5: #{net_loss_forward.3} parent=1 // loop_body
      %s16 = ssub.s32 %s11, 1
      %s17 = ssub.s32 %s11, 2
      %s18 = sadd.s32 %s11, 1
      %s19 = ssub.s32 %s11, %s18
      %p20 = scmp.eq.s32.totalorder %s19, 0
      %s22 = sadd.s32 %s21, 1
      %s23 = scalar_select %p20, %s21, %s22
      %p26 = pneg %p20
      %p27 = scmp.eq.s32.totalorder %s11, 2
      %p28 = por %p26, %p27
      %p29 = scmp.ne.s32.totalorder %s21, %s24
      %p30 = scmp.eq.s32.totalorder %s11, 0
      %p31 = por %p29, %p30
      %p32 = scmp.ne.s32.totalorder %s21, %s24
      %p33 = scmp.eq.s32.totalorder %s16, 2
      %p34 = por %p32, %p33
      %p35 = scmp.ne.s32.totalorder %s24, %s25
      %p36 = scmp.eq.s32.totalorder %s16, 0
      %p37 = por %p35, %p36
      %p38 = scmp.ne.s32.totalorder %s24, %s25
      %p39 = scmp.eq.s32.totalorder %s17, 2
      %p40 = por %p38, %p39
      %p42 = scmp.ne.s32.totalorder %s25, %s41
      %p43 = scmp.eq.s32.totalorder %s17, 0
      %p44 = por %p42, %p43
      %s45 = ssub.s32 %s11, %s18
      %p46 = scmp.eq.s32.totalorder %s45, 0
      %s48 = sadd.s32 %s47, 1
      %s49 = scalar_select %p46, %s47, %s48
      %p52 = pneg %p46
      %p53 = scmp.eq.s32.totalorder %s11, 2
      %p54 = por %p52, %p53
      %p55 = scmp.ne.s32.totalorder %s47, %s50
      %p56 = scmp.eq.s32.totalorder %s11, 0
      %p57 = por %p55, %p56
      %p58 = scmp.ne.s32.totalorder %s47, %s50
      %p59 = scmp.eq.s32.totalorder %s16, 2
      %p60 = por %p58, %p59
      %p61 = scmp.ne.s32.totalorder %s50, %s51
      %p62 = scmp.eq.s32.totalorder %s16, 0
      %p63 = por %p61, %p62
      %p64 = scmp.ne.s32.totalorder %s50, %s51
      %p65 = scmp.eq.s32.totalorder %s17, 2
      %p66 = por %p64, %p65
      %p68 = scmp.ne.s32.totalorder %s51, %s67
      %p69 = scmp.eq.s32.totalorder %s17, 0
      %p70 = por %p68, %p69
      %s71 = ssub.s32 %s11, %s18
      %p72 = scmp.eq.s32.totalorder %s71, 0
      %s74 = sadd.s32 %s73, 1
      %s75 = scalar_select %p72, %s73, %s74
      %p78 = pneg %p72
      %p79 = scmp.eq.s32.totalorder %s11, 2
      %p80 = por %p78, %p79
      %p81 = scmp.ne.s32.totalorder %s73, %s76
      %p82 = scmp.eq.s32.totalorder %s11, 0
      %p83 = por %p81, %p82
      %p84 = scmp.ne.s32.totalorder %s73, %s76
      %p85 = scmp.eq.s32.totalorder %s16, 2
      %p86 = por %p84, %p85
      %p87 = scmp.ne.s32.totalorder %s76, %s77
      %p88 = scmp.eq.s32.totalorder %s16, 0
      %p89 = por %p87, %p88
      %p90 = scmp.ne.s32.totalorder %s76, %s77
      %p91 = scmp.eq.s32.totalorder %s17, 2
      %p92 = por %p90, %p91
      %p94 = scmp.ne.s32.totalorder %s77, %s93
      %p95 = scmp.eq.s32.totalorder %s17, 0
      %p96 = por %p94, %p95
      %s97 = ssub.s32 %s11, %s18
      %p98 = scmp.eq.s32.totalorder %s97, 0
      %s100 = sadd.s32 %s99, 1
      %s101 = scalar_select %p98, %s99, %s100
      %p104 = pneg %p98
      %p105 = scmp.eq.s32.totalorder %s11, 2
      %p106 = por %p104, %p105
      %p107 = scmp.ne.s32.totalorder %s99, %s102
      %p108 = scmp.eq.s32.totalorder %s11, 0
      %p109 = por %p107, %p108
      %p110 = scmp.ne.s32.totalorder %s99, %s102
      %p111 = scmp.eq.s32.totalorder %s16, 2
      %p112 = por %p110, %p111
      %p113 = scmp.ne.s32.totalorder %s102, %s103
      %p114 = scmp.eq.s32.totalorder %s16, 0
      %p115 = por %p113, %p114
      %p116 = scmp.ne.s32.totalorder %s102, %s103
      %p117 = scmp.eq.s32.totalorder %s17, 2
      %p118 = por %p116, %p117
      %p120 = scmp.ne.s32.totalorder %s103, %s119
      %p121 = scmp.eq.s32.totalorder %s17, 0
      %p122 = por %p120, %p121
      %s124 = sadd.s32 %s123, 1
      %p127 = scmp.eq.s32.totalorder %s11, 2
      %p128 = scmp.ne.s32.totalorder %s123, %s125
      %p129 = scmp.eq.s32.totalorder %s11, 0
      %p130 = por %p128, %p129
      %p131 = scmp.ne.s32.totalorder %s123, %s125
      %p132 = scmp.eq.s32.totalorder %s16, 2
      %p133 = por %p131, %p132
      %p134 = scmp.ne.s32.totalorder %s125, %s126
      %p135 = scmp.eq.s32.totalorder %s16, 0
      %p136 = por %p134, %p135
      %p137 = scmp.ne.s32.totalorder %s125, %s126
      %p138 = scmp.eq.s32.totalorder %s17, 2
      %p139 = por %p137, %p138
      %p141 = scmp.ne.s32.totalorder %s126, %s140
      %p142 = scmp.eq.s32.totalorder %s17, 0
      %p143 = por %p141, %p142
      %p144 = scmp.le.s32.totalorder 1, %s11
      %p145 = scmp.lt.s32.totalorder %s11, 4
      %p146 = pnand %p144, %p145
      %p147 = pneg %p146
      // Predicated region
      $region9: #{net_loss_forward.3} parent=5 // pred_check
        _
      $region10: #{net_loss_forward.3} parent=5 // pred_check_branch
        %149 = sbr.rel (%p146) target = $region12
      $region11: #{net_loss_forward.3} parent=5 // pred_region
        %s150 = ssub.s32 %s11, 1
      $region12: #{net_loss_forward.3} parent=5 // pred_fallthru
        _
      %p151 = scmp.lt.s32.totalorder %s11, 3
      // Predicated region
      $region13: #{net_loss_forward.3} parent=5 // pred_check
        %p152 = pneg %p151
      $region14: #{net_loss_forward.3} parent=5 // pred_check_branch
        %154 = sbr.rel (%p152) target = $region16
      $region15: #{net_loss_forward.3} parent=5 // pred_region
        // Predicated region
        $region17: #{net_loss_forward.3} parent=15 // pred_check
          %p155 = pneg %p31
        $region18: #{net_loss_forward.3} parent=15 // pred_check_branch
          %157 = sbr.rel (%p155) target = $region20
        $region19: #{net_loss_forward.3} parent=15 // pred_region
          %s158 = smul.u32 4, %s11
          %p159 = scmp.lt.s32.totalorder %s158, 11
          %s160 = scalar_select %p159, %s158, 11
          %s161 = smul.addr %s160, 4
          %s162 = scalar_lea.vmem %s0, %s161
          %s163 = smul.u32 4, %s11
        $region20: #{net_loss_forward.3} parent=15 // pred_fallthru
          _
        // Predicated region
        $region21: #{net_loss_forward.3} parent=15 // pred_check
          %p164 = pneg %p57
        $region22: #{net_loss_forward.3} parent=15 // pred_check_branch
          %166 = sbr.rel (%p164) target = $region24
        $region23: #{net_loss_forward.3} parent=15 // pred_region
          %s167 = smul.u32 4, %s11
          %p168 = scmp.lt.s32.totalorder %s167, 11
          %s169 = scalar_select %p168, %s167, 11
          %s170 = smul.addr %s169, 4
          %s171 = scalar_lea.vmem %s1, %s170
          %s172 = smul.u32 4, %s11
        $region24: #{net_loss_forward.3} parent=15 // pred_fallthru
          _
        // Predicated region
        $region25: #{net_loss_forward.3} parent=15 // pred_check
          %p173 = pneg %p83
        $region26: #{net_loss_forward.3} parent=15 // pred_check_branch
          %175 = sbr.rel (%p173) target = $region28
        $region27: #{net_loss_forward.3} parent=15 // pred_region
          %s176 = smul.u32 4, %s11
          %p177 = scmp.lt.s32.totalorder %s176, 11
          %s178 = scalar_select %p177, %s176, 11
          %s179 = smul.addr %s178, 8
          %s180 = scalar_lea.vmem %s2, %s179
          %s181 = smul.u32 4, %s11
        $region28: #{net_loss_forward.3} parent=15 // pred_fallthru
          _
        // Predicated region
        $region29: #{net_loss_forward.3} parent=15 // pred_check
          %p182 = pneg %p109
        $region30: #{net_loss_forward.3} parent=15 // pred_check_branch
          %184 = sbr.rel (%p182) target = $region32
        $region31: #{net_loss_forward.3} parent=15 // pred_region
          %s185 = smul.u32 4, %s11
          %p186 = scmp.lt.s32.totalorder %s185, 11
          %s187 = scalar_select %p186, %s185, 11
          %s188 = scalar_lea.vmem %s3, %s187
          %s189 = smul.u32 4, %s11
        $region32: #{net_loss_forward.3} parent=15 // pred_fallthru
          _
      $region16: #{net_loss_forward.3} parent=5 // pred_fallthru
        _
      %p190 = scmp.le.s32.totalorder 1, %s11
      %p191 = scmp.lt.s32.totalorder %s11, 4
      %p192 = pnand %p190, %p191
      %p193 = pneg %p192
      // Predicated region
      $region33: #{net_loss_forward.3} parent=5 // pred_check
        _
      $region34: #{net_loss_forward.3} parent=5 // pred_check_branch
        %195 = sbr.rel (%p192) target = $region36
      $region35: #{net_loss_forward.3} parent=5 // pred_region
        %s196 = ssub.s32 %s11, 1
        %s197 = smul.u32 4, %s16
        %p198 = scmp.lt.s32.totalorder %s197, 11
        %s199 = scalar_select %p198, %s197, 11
        %s200 = smul.addr %s199, 4
        %s201 = scalar_lea.vmem %s0, %s200
        %p202 = pneg %p37
        %p203 = pneg %p34
        %s204 = smul.u32 4, %s16
        %p205 = scmp.lt.s32.totalorder %s204, 11
        %s206 = scalar_select %p205, %s204, 11
        %s207 = smul.addr %s206, 4
        %s208 = scalar_lea.vmem %s1, %s207
        %p209 = pneg %p63
        %p210 = pneg %p60
        %s211 = smul.u32 4, %s16
        %p212 = scmp.lt.s32.totalorder %s211, 11
        %s213 = scalar_select %p212, %s211, 11
        %s214 = smul.addr %s213, 8
        %s215 = scalar_lea.vmem %s2, %s214
        %p216 = pneg %p89
        %p217 = pneg %p86
        %s218 = smul.u32 4, %s16
        %p219 = scmp.lt.s32.totalorder %s218, 11
        %s220 = scalar_select %p219, %s218, 11
        %s221 = scalar_lea.vmem %s3, %s220
        %p222 = pneg %p115
        %p223 = pneg %p112
        %p224 = pneg %p136
        %p225 = pneg %p133
        %s226 = smul.u32 4, %s16
        %p227 = scmp.lt.s32.totalorder %s226, 11
        %s228 = scalar_select %p227, %s226, 11
        %s229 = smul.addr %s228, 4
        %s230 = scalar_lea.vmem %s0, %s229
        %s231 = smul.u32 4, %s16
        %s232 = smul.u32 4, %s16
        %p233 = scmp.lt.s32.totalorder %s232, 11
        %s234 = scalar_select %p233, %s232, 11
        %s235 = smul.addr %s234, 4
        %s236 = scalar_lea.vmem %s1, %s235
        %s237 = smul.u32 4, %s16
        %s238 = smul.u32 4, %s16
        %p239 = scmp.lt.s32.totalorder %s238, 11
        %s240 = scalar_select %p239, %s238, 11
        %s241 = smul.addr %s240, 8
        %s242 = scalar_lea.vmem %s2, %s241
        %s243 = smul.u32 4, %s16
        %s244 = smul.u32 4, %s16
        %p245 = scmp.lt.s32.totalorder %s244, 11
        %s246 = scalar_select %p245, %s244, 11
        %s247 = scalar_lea.vmem %s3, %s246
        %s248 = smul.u32 4, %s16
        %p249 = scmp.eq.s32.totalorder %s16, 0
        // Predicated region
        $region37: #{net_loss_forward.3} parent=35 // pred_check
          %p250 = pneg %p249
        $region38: #{net_loss_forward.3} parent=35 // pred_check_branch
          %252 = sbr.rel (%p250) target = $region40
        $region39: #{net_loss_forward.3} parent=35 // pred_region
          %s253 = scalar_lea.smem [#allocation2], 0
          %254 = sst [smem:[%s253]] 0.0
          %s255 = scalar_lea.smem [#allocation2], 1
          %256 = sst [smem:[%s255]] 0.0
          %s257 = scalar_lea.smem [#allocation2], 2
          %258 = sst [smem:[%s257]] 0.0
        $region40: #{net_loss_forward.3} parent=35 // pred_fallthru
          _
        %v259 = vld [vmem:[%s247] sm:$0xf]
        %vm260 = vcmp.gt.s32.totalorder %v259, 0
        %v261 = vsel %vm260, 1, 0
        %v262 = vcvt.s32.f32 %v261
        %vm263 = vcmp.ge.s32.totalorder %v259, 0
        %v264 = vsel %vm263, 1, 0
        %v265 = vcvt.s32.f32 %v264
        %v266 = vld [vmem:[%s230] sm:$0xff]
        %v267 = vld [vmem:[%s230 + $0x8] sm:$0xff]
        %v268 = vld [vmem:[%s236] sm:$0xff]
        %v269 = vld [vmem:[%s236 + $0x8] sm:$0xff]
        %v270 = vsub.f32 %v266, %v268
        %v271 = vsub.f32 %v267, %v269
        %v272 = vand.u32 2147483647, %v270
        %v273 = vand.u32 2147483647, %v271
        %vm274 = vcmp.lt.f32.partialorder %v272, 1.0
        %vm275 = vcmp.lt.f32.partialorder %v273, 1.0
        %v276 = vmul.f32 %v272, 0.5
        %v277 = vmul.f32 %v273, 0.5
        %v278 = vmul.f32 %v276, %v272
        %v279 = vmul.f32 %v277, %v273
        %v280 = vsub.f32 %v272, 0.5
        %v281 = vsub.f32 %v273, 0.5
        %v282 = vsel %vm274, %v278, %v280
        %v283 = vsel %vm275, %v279, %v281
        %v284 = vld [vmem:[%s242] sm:$0xff]
        %v285 = vld [vmem:[%s242 + $0x8] sm:$0xff]
        %v286 = vld [vmem:[%s242 + $0x10] sm:$0xff]
        %v287 = vld [vmem:[%s242 + $0x18] sm:$0xff]
        %v288 = vrot.slane %v284, 4
        %v289 = vmax.f32 %v284, %v288
        %v290 = vrot.slane %v289, 2
        %v291 = vmax.f32 %v289, %v290
        %v292 = vrot.slane %v291, 1
        %v293 = vmax.f32 %v291, %v292
        %v294 = vrot.slane %v285, 4
        %v295 = vmax.f32 %v285, %v294
        %v296 = vrot.slane %v295, 2
        %v297 = vmax.f32 %v295, %v296
        %v298 = vrot.slane %v297, 1
        %v299 = vmax.f32 %v297, %v298
        %v300 = vrot.slane %v286, 4
        %v301 = vmax.f32 %v286, %v300
        %v302 = vrot.slane %v301, 2
        %v303 = vmax.f32 %v301, %v302
        %v304 = vrot.slane %v303, 1
        %v305 = vmax.f32 %v303, %v304
        %v306 = vrot.slane %v287, 4
        %v307 = vmax.f32 %v287, %v306
        %v308 = vrot.slane %v307, 2
        %v309 = vmax.f32 %v307, %v308
        %v310 = vrot.slane %v309, 1
        %v311 = vmax.f32 %v309, %v310
        %v312 = vsub.f32 %v284, %v293
        %v313 = vsub.f32 %v285, %v299
        %v314 = vsub.f32 %v286, %v305
        %v315 = vsub.f32 %v287, %v311
        %v316 = vmul.f32 %v312, 1.442695
        %v317 = vpow.pop %v316
        %v318 = vmul.f32 %v313, 1.442695
        %v319 = vpow.pop %v318
        %v320 = vmul.f32 %v314, 1.442695
        %v321 = vpow.pop %v320
        %v322 = vmul.f32 %v315, 1.442695
        %v323 = vpow.pop %v322
        %v324 = vrot.slane %v317, 4
        %v325 = vadd.f32 %v317, %v324
        %v326 = vrot.slane %v325, 2
        %v327 = vadd.f32 %v325, %v326
        %v328 = vrot.slane %v327, 1
        %v329 = vadd.f32 %v327, %v328
        %v330 = vrot.slane %v319, 4
        %v331 = vadd.f32 %v319, %v330
        %v332 = vrot.slane %v331, 2
        %v333 = vadd.f32 %v331, %v332
        %v334 = vrot.slane %v333, 1
        %v335 = vadd.f32 %v333, %v334
        %v336 = vrot.slane %v321, 4
        %v337 = vadd.f32 %v321, %v336
        %v338 = vrot.slane %v337, 2
        %v339 = vadd.f32 %v337, %v338
        %v340 = vrot.slane %v339, 1
        %v341 = vadd.f32 %v339, %v340
        %v342 = vrot.slane %v323, 4
        %v343 = vadd.f32 %v323, %v342
        %v344 = vrot.slane %v343, 2
        %v345 = vadd.f32 %v343, %v344
        %v346 = vrot.slane %v345, 1
        %v347 = vadd.f32 %v345, %v346
        %v348 = vlog2.pop %v329
        %v349 = vmul.f32 %v348, 0.6931472
        %v350 = vlog2.pop %v335
        %v351 = vmul.f32 %v350, 0.6931472
        %v352 = vlog2.pop %v341
        %v353 = vmul.f32 %v352, 0.6931472
        %v354 = vlog2.pop %v347
        %v355 = vmul.f32 %v354, 0.6931472
        %v356 = vadd.f32 %v293, %v349
        %v357 = vadd.f32 %v299, %v351
        %v358 = vadd.f32 %v305, %v353
        %v359 = vadd.f32 %v311, %v355
        %v360 = vlaneseq
        %v361 = vshrl.u32 %v360, 7
        %v362 = vperm.slane %v259, 0
        %v363 = vperm.slane %v259, 1
        %v364 = vperm.slane %v259, 2
        %v365 = vperm.slane %v259, 3
        %vm366 = vcmp.eq.s32.totalorder %v361, %v362
        %vm367 = vcmp.eq.s32.totalorder %v361, %v363
        %vm368 = vcmp.eq.s32.totalorder %v361, %v364
        %vm369 = vcmp.eq.s32.totalorder %v361, %v365
        %v370 = vsel %vm366, %v284, 0.0
        %v371 = vsel %vm367, %v285, 0.0
        %v372 = vsel %vm368, %v286, 0.0
        %v373 = vsel %vm369, %v287, 0.0
        %v374 = vrot.slane %v370, 4
        %v375 = vadd.f32 %v370, %v374
        %v376 = vrot.slane %v375, 2
        %v377 = vadd.f32 %v375, %v376
        %v378 = vrot.slane %v377, 1
        %v379 = vadd.f32 %v377, %v378
        %v380 = vrot.slane %v371, 4
        %v381 = vadd.f32 %v371, %v380
        %v382 = vrot.slane %v381, 2
        %v383 = vadd.f32 %v381, %v382
        %v384 = vrot.slane %v383, 1
        %v385 = vadd.f32 %v383, %v384
        %v386 = vrot.slane %v372, 4
        %v387 = vadd.f32 %v372, %v386
        %v388 = vrot.slane %v387, 2
        %v389 = vadd.f32 %v387, %v388
        %v390 = vrot.slane %v389, 1
        %v391 = vadd.f32 %v389, %v390
        %v392 = vrot.slane %v373, 4
        %v393 = vadd.f32 %v373, %v392
        %v394 = vrot.slane %v393, 2
        %v395 = vadd.f32 %v393, %v394
        %v396 = vrot.slane %v395, 1
        %v397 = vadd.f32 %v395, %v396
        %v398 = vsub.f32 %v356, %v379
        %v399 = vsub.f32 %v357, %v385
        %v400 = vsub.f32 %v358, %v391
        %v401 = vsub.f32 %v359, %v397
        %v403 = vperm.slane %v265, 0
        %v404 = vperm.slane %v265, 1
        %v405 = vperm.slane %v265, 2
        %v406 = vperm.slane %v265, 3
        %v411 = vmul.f32 %v398, %v403
        %v412 = vmul.f32 %v399, %v404
        %v413 = vmul.f32 %v400, %v405
        %v414 = vmul.f32 %v401, %v406
        %s415 = sld [smem:[#allocation2]]
        %v417 = vperm.slane %v262, 0
        %v418 = vperm.slane %v262, 1
        %v419 = vperm.slane %v262, 2
        %v420 = vperm.slane %v262, 3
        %v421 = vrot.slane %v418, 4
        %v422 = vrot.slane %v420, 4
        %vm423 = vcmask 1043456
        %v424 = vsel %vm423, %v417, %v421
        %v425 = vsel %vm423, %v419, %v422
        %v428 = vmul.f32 %v282, %v424
        %v429 = vmul.f32 %v283, %v425
        %432 = vst [vmem:[#allocation1] ss:$2 sm:$0xff] %v428
        %s433 = scalar_lea.vmem [#allocation1], 16
        %434 = vst [vmem:[%s433] ss:$2 sm:$0xff] %v429
        %v435 = vld.sshfl [vmem:[#allocation1] sm:$0xff pattern:$0x75316420]
        %v436 = vld.sshfl [vmem:[#allocation1 + $0x8] sm:$0xff pattern:$0x75316420]
        %v437 = vld.sshfl [vmem:[#allocation1 + $0x10] sm:$0xff pattern:$0x75316420]
        %v438 = vld.sshfl [vmem:[#allocation1 + $0x18] sm:$0xff pattern:$0x75316420]
        %v443 = vsel %vm423, %v435, 0.0
        %v444 = vsel %vm423, %v436, 0.0
        %v445 = vadd.f32 %v443, %v444
        %v446 = vsel %vm423, %v437, 0.0
        %v447 = vadd.f32 %v445, %v446
        %v448 = vsel %vm423, %v438, 0.0
        %v449 = vadd.f32 %v447, %v448
        %450 = vadd.xlane.f32.xlu0 %v449
        %v451 = vpop.xlane.xlu0 %450
        %v452 = vrot.slane %v451, 4
        %v453 = vadd.f32 %v451, %v452
        %v454 = vrot.slane %v453, 2
        %v455 = vadd.f32 %v453, %v454
        %v456 = vrot.slane %v455, 1
        %v457 = vadd.f32 %v455, %v456
        %s458 = vtos %v457
        %s459 = sadd.f32 %s415, %s458
        %s460 = scalar_lea.smem [#allocation2], 0
        %461 = sst [smem:[%s460]] %s459
        %s462 = sld [smem:[#allocation2 + $0x1]]
        %vm463 = vcmask 1040384
        %v464 = vsel %vm463, %v411, 0.0
        %v465 = vsel %vm463, %v412, 0.0
        %v466 = vadd.f32 %v464, %v465
        %v467 = vsel %vm463, %v413, 0.0
        %v468 = vadd.f32 %v466, %v467
        %v469 = vsel %vm463, %v414, 0.0
        %v470 = vadd.f32 %v468, %v469
        %471 = vadd.xlane.f32.xlu0 %v470
        %v472 = vpop.xlane.xlu0 %471
        %v473 = vrot.slane %v472, 4
        %v474 = vadd.f32 %v472, %v473
        %v475 = vrot.slane %v474, 2
        %v476 = vadd.f32 %v474, %v475
        %v477 = vrot.slane %v476, 1
        %v478 = vadd.f32 %v476, %v477
        %s479 = vtos %v478
        %s480 = sadd.f32 %s462, %s479
        %s481 = scalar_lea.smem [#allocation2], 1
        %482 = sst [smem:[%s481]] %s480
        %s483 = sld [smem:[#allocation2 + $0x2]]
        %v488 = vsel %vm463, %v417, 0.0
        %v489 = vsel %vm463, %v418, 0.0
        %v490 = vadd.f32 %v488, %v489
        %v491 = vsel %vm463, %v419, 0.0
        %v492 = vadd.f32 %v490, %v491
        %v493 = vsel %vm463, %v420, 0.0
        %v494 = vadd.f32 %v492, %v493
        %495 = vadd.xlane.f32.xlu0 %v494
        %v496 = vpop.xlane.xlu0 %495
        %v497 = vrot.slane %v496, 4
        %v498 = vadd.f32 %v496, %v497
        %v499 = vrot.slane %v498, 2
        %v500 = vadd.f32 %v498, %v499
        %v501 = vrot.slane %v500, 1
        %v502 = vadd.f32 %v500, %v501
        %s503 = vtos %v502
        %s504 = sadd.f32 %s483, %s503
        %s505 = scalar_lea.smem [#allocation2], 2
        %506 = sst [smem:[%s505]] %s504
        // Predicated region
        $region41: #{net_loss_forward.3} parent=35 // pred_check
          %p507 = pneg %p133
        $region42: #{net_loss_forward.3} parent=35 // pred_check_branch
          %509 = sbr.rel (%p507) target = $region44
        $region43: #{net_loss_forward.3} parent=35 // pred_region
          %511 = vsyncadd [#allocation3], 0
          %s513 = sshll.u32 %s4, 4
          %s514 = int_to_ptr.vmem [resolvable:$true] %s513
          %516 = dma.smem_to_vmem [#allocation2], 16, %s514, [#allocation3]
        $region44: #{net_loss_forward.3} parent=35 // pred_fallthru
          _
        // Predicated region
        $region45: #{net_loss_forward.3} parent=35 // pred_check
          %p517 = pneg %p133
        $region46: #{net_loss_forward.3} parent=35 // pred_check_branch
          %519 = sbr.rel (%p517) target = $region48
        $region47: #{net_loss_forward.3} parent=35 // pred_region
          %521 = dma.done [#allocation3], 16
        $region48: #{net_loss_forward.3} parent=35 // pred_fallthru
          _
        %522 = sfence
      $region36: #{net_loss_forward.3} parent=5 // pred_fallthru
        _
      %p523 = scmp.le.s32.totalorder 2, %s11
      // Predicated region
      $region49: #{net_loss_forward.3} parent=5 // pred_check
        %p524 = pneg %p523
      $region50: #{net_loss_forward.3} parent=5 // pred_check_branch
        %526 = sbr.rel (%p524) target = $region52
      $region51: #{net_loss_forward.3} parent=5 // pred_region
        %s527 = ssub.s32 %s11, 2
      $region52: #{net_loss_forward.3} parent=5 // pred_fallthru
        _
    $region6: #{net_loss_forward.3} parent=1 // loop_footer
      %s15 = sadd.s32 1, %s11
    $region7: #{net_loss_forward.3} parent=1 // loop_footer_branch
      %10 = sbr.rel target = $region3
    $region8: #{net_loss_forward.3} parent=1 // loop_exit
      _
    %528 = vsyncpa [#allocation3], 1
    %s529 = scalar_lea.sflag [#allocation3], 1
    %530 = vsyncpa %s529, 1

</llo_original>
